<compile_context>
chip_gen: v5e
topology: v5e:2x2
jax: 0.10.0
libtpu: 0.0.40
codegen_flags: <defaults>
</compile_context>

<pallas_src>
import functools
import numpy as np
import jax
import jax.numpy as jnp
from jax import lax
from jax.experimental import pallas as pl
from jax.experimental.pallas import tpu as pltpu


# ----------------------------- fused Pallas kernels ------------------------------

def _mha_block_kernel(q_in_ref, kv_in_ref, w_qkv_ref, b_qkv_ref, w_c_ref, b_c_ref,
                      g_ref, beta_ref, attn_out_ref, emb_ref,
                      *, n_head, n_dim, causal, self_attn, eps):
    """One batch element: QKV proj -> per-head attention -> concat proj -> +res -> LN."""
    d_model = n_head * n_dim
    x = q_in_ref[0]                                    # (Lq, d_model) f32, also residual
    x_bf = x.astype(jnp.bfloat16)
    w_qkv = w_qkv_ref[...]                             # (d_model, 3*d_model) bf16
    b_qkv = b_qkv_ref[...]                             # (1, 3*d_model) f32

    if self_attn:
        # Single fused (Lq, d_model) @ (d_model, 3*d_model) matmul.
        qkv = jnp.dot(x_bf, w_qkv, preferred_element_type=jnp.float32) + b_qkv
        q = qkv[:, :d_model]
        k = qkv[:, d_model:2 * d_model]
        v = qkv[:, 2 * d_model:]
    else:
        kv_src = kv_in_ref[0].astype(jnp.bfloat16)     # (Lk, d_model)
        q = jnp.dot(x_bf, w_qkv[:, :d_model],
                    preferred_element_type=jnp.float32) + b_qkv[:, :d_model]
        kv = jnp.dot(kv_src, w_qkv[:, d_model:],
                     preferred_element_type=jnp.float32) + b_qkv[:, d_model:]
        k = kv[:, :d_model]
        v = kv[:, d_model:]

    Lq = q.shape[0]
    Lk = k.shape[0]

    if causal:  # hoisted once (same mask for every head)
        row = lax.broadcasted_iota(jnp.int32, (Lq, Lk), 0)
        col = lax.broadcasted_iota(jnp.int32, (Lq, Lk), 1)
        future = col > row

    head_outs = []
    for h in range(n_head):                            # static unroll over heads
        lo, hi = h * n_dim, (h + 1) * n_dim
        qh = q[:, lo:hi].astype(jnp.bfloat16)          # (Lq, D)
        kh = k[:, lo:hi].astype(jnp.bfloat16)          # (Lk, D)
        vh = v[:, lo:hi].astype(jnp.bfloat16)          # (Lk, D)
        # q @ k^T (contract head dim); the 1/sqrt(n_dim) scale is pre-folded into Wq/bq.
        s = lax.dot_general(qh, kh, (((1,), (1,)), ((), ())),
                            preferred_element_type=jnp.float32)
        if causal:
            s = jnp.where(future, jnp.float32(-1e9), s)
        m = jnp.max(s, axis=-1, keepdims=True)
        p = jnp.exp(s - m)
        inv = pl.reciprocal(jnp.sum(p, axis=-1, keepdims=True), approx=True)
        a = (p * inv).astype(jnp.bfloat16)
        head_outs.append(jnp.dot(a, vh, preferred_element_type=jnp.float32))
    attn = jnp.concatenate(head_outs, axis=-1)         # (Lq, d_model) f32

    # Concat projection (pre-norm output; the reference FFN consumes this).
    o = jnp.dot(attn.astype(jnp.bfloat16), w_c_ref[...],
                preferred_element_type=jnp.float32) + b_c_ref[...]
    attn_out_ref[0] = o.astype(attn_out_ref.dtype)

    # Residual + LayerNorm epilogue (f32).
    z = o + x
    mean = jnp.mean(z, axis=-1, keepdims=True)
    var = jnp.mean((z - mean) ** 2, axis=-1, keepdims=True)
    normed = (z - mean) * lax.rsqrt(var + eps)
    emb_ref[0] = (normed * g_ref[...] + beta_ref[...]).astype(emb_ref.dtype)


def _ffn_block_kernel(x_ref, res_ref, w1_ref, b1_ref, w2_ref, b2_ref, g_ref, beta_ref,
                      emb_ref, *, eps):
    """One batch element: 1x1-conv (matmul) + ReLU, 1x1-conv, residual add, LayerNorm."""
    x = x_ref[0]                                       # (L, d_model) f32
    h = jnp.dot(x.astype(jnp.bfloat16), w1_ref[...],
                preferred_element_type=jnp.float32) + b1_ref[...]
    h = jnp.maximum(h, 0.0)
    y = jnp.dot(h.astype(jnp.bfloat16), w2_ref[...],
                preferred_element_type=jnp.float32) + b2_ref[...]
    z = y + res_ref[0]
    mean = jnp.mean(z, axis=-1, keepdims=True)
    var = jnp.mean((z - mean) ** 2, axis=-1, keepdims=True)
    normed = (z - mean) * lax.rsqrt(var + eps)
    emb_ref[0] = (normed * g_ref[...] + beta_ref[...]).astype(emb_ref.dtype)


# ------------------------------ pallas_call wrappers ------------------------------

def mha_block(q_in, kv_in, pp, *, n_head, n_dim, causal, self_attn, eps=1e-5):
    """Returns (pre_norm_attn_output, layer_norm(attn_output + q_in))."""
    B, Lq, d_model = q_in.shape
    Lk = kv_in.shape[1]
    kernel = functools.partial(_mha_block_kernel, n_head=n_head, n_dim=n_dim,
                               causal=causal, self_attn=self_attn, eps=eps)
    return pl.pallas_call(
        kernel,
        out_shape=(jax.ShapeDtypeStruct((B, Lq, d_model), jnp.float32),
                   jax.ShapeDtypeStruct((B, Lq, d_model), jnp.float32)),
        grid=(B,),
        in_specs=[
            pl.BlockSpec((1, Lq, d_model), lambda b: (b, 0, 0)),          # query / residual
            pl.BlockSpec((1, Lk, d_model), lambda b: (b, 0, 0)),          # key/value source
            pl.BlockSpec((d_model, 3 * d_model), lambda b: (0, 0)),       # W_qkv (bf16)
            pl.BlockSpec((1, 3 * d_model), lambda b: (0, 0)),             # b_qkv
            pl.BlockSpec((d_model, d_model), lambda b: (0, 0)),           # W_c (bf16)
            pl.BlockSpec((1, d_model), lambda b: (0, 0)),                 # b_c
            pl.BlockSpec((1, d_model), lambda b: (0, 0)),                 # ln gamma
            pl.BlockSpec((1, d_model), lambda b: (0, 0)),                 # ln beta
        ],
        out_specs=(pl.BlockSpec((1, Lq, d_model), lambda b: (b, 0, 0)),
                   pl.BlockSpec((1, Lq, d_model), lambda b: (b, 0, 0))),
        compiler_params=pltpu.CompilerParams(dimension_semantics=("parallel",)),
    )(q_in, kv_in, pp["w_qkv"], pp["b_qkv"], pp["w_c"], pp["b_c"],
      pp["ln_g"], pp["ln_b"])


def ffn_block(x, residual, pp, *, eps=1e-5):
    """Returns layer_norm(pos_ffn(x) + residual)."""
    B, L, d_model = x.shape
    d_ff = pp["w1"].shape[1]
    kernel = functools.partial(_ffn_block_kernel, eps=eps)
    return pl.pallas_call(
        kernel,
        out_shape=jax.ShapeDtypeStruct((B, L, d_model), jnp.float32),
        grid=(B,),
        in_specs=[
            pl.BlockSpec((1, L, d_model), lambda b: (b, 0, 0)),           # FFN input
            pl.BlockSpec((1, L, d_model), lambda b: (b, 0, 0)),           # residual
            pl.BlockSpec((d_model, d_ff), lambda b: (0, 0)),              # W1 (bf16)
            pl.BlockSpec((1, d_ff), lambda b: (0, 0)),                    # b1
            pl.BlockSpec((d_ff, d_model), lambda b: (0, 0)),              # W2 (bf16)
            pl.BlockSpec((1, d_model), lambda b: (0, 0)),                 # b2
            pl.BlockSpec((1, d_model), lambda b: (0, 0)),                 # ln gamma
            pl.BlockSpec((1, d_model), lambda b: (0, 0)),                 # ln beta
        ],
        out_specs=pl.BlockSpec((1, L, d_model), lambda b: (b, 0, 0)),
        compiler_params=pltpu.CompilerParams(dimension_semantics=("parallel",)),
    )(x, residual, pp["w1"], pp["b1"], pp["w2"], pp["b2"], pp["ln_g"], pp["ln_b"])


# ------------------------------ model forward ------------------------------

def decoder_forward(pp, input_data, encoder_output, *, sos_idx, n_layers, n_head, n_dim):
    """Training-path (is_eval=False) forward of Decoder."""
    B, L = input_data.shape
    sos = jnp.full((B, 1), sos_idx, dtype=input_data.dtype)
    shifted = jnp.concatenate([sos, input_data[:, :-1]], axis=-1)
    # Embedding gathers are left to XLA (indexed by token ids, as in the reference).
    embedded = (pp["emb"][shifted] + pp["pos_emb"][shifted]).astype(jnp.float32)

    for _ in range(n_layers):
        # self-attention (causal) + residual + LN
        _, embedded = mha_block(embedded, embedded, pp, n_head=n_head, n_dim=n_dim,
                                causal=True, self_attn=True)
        # cross-attention + residual + LN (also keep the pre-norm output for the FFN)
        cross_out, embedded = mha_block(embedded, encoder_output, pp, n_head=n_head,
                                        n_dim=n_dim, causal=False, self_attn=False)
        # FFN consumes the PRE-norm cross-attention output (matches the reference).
        embedded = ffn_block(cross_out, embedded, pp)
    return embedded


# ------------------------------ params / tables ------------------------------

def get_sinusoid_encoding_table(n_position, d_model):
    pos = np.arange(n_position, dtype=np.float64)[:, None]
    i = np.arange(d_model)[None, :]
    angle = pos / np.power(10000.0, 2.0 * (i // 2) / d_model)
    table = np.zeros((n_position, d_model), dtype=np.float64)
    table[:, 0::2] = np.sin(angle[:, 0::2])
    table[:, 1::2] = np.cos(angle[:, 1::2])
    return jnp.asarray(table, dtype=jnp.float32)


def init_params(key, vocab_size, n_dim, n_head):
    d_model = n_dim * n_head
    d_ff = n_dim * 2
    keys = jax.random.split(key, 12)
    s = 0.05

    def w(k, shape):
        return jax.random.normal(k, shape, dtype=jnp.float32) * s

    return {
        "emb": w(keys[0], (vocab_size, d_model)),
        "pos_emb": get_sinusoid_encoding_table(vocab_size, d_model),
        "mha": {
            "wq": w(keys[1], (d_model, d_model)), "bq": w(keys[2], (d_model,)),
            "wk": w(keys[3], (d_model, d_model)), "bk": w(keys[4], (d_model,)),
            "wv": w(keys[5], (d_model, d_model)), "bv": w(keys[6], (d_model,)),
            "wc": w(keys[7], (d_model, d_model)), "bc": jnp.zeros((d_model,), jnp.float32),
        },
        "ffn": {
            "w1": w(keys[8], (d_model, d_ff)), "b1": w(keys[9], (d_ff,)),
            "w2": w(keys[10], (d_ff, d_model)), "b2": jnp.zeros((d_model,), jnp.float32),
        },
        "ln_g": jnp.ones((d_model,), jnp.float32),
        "ln_b": jnp.zeros((d_model,), jnp.float32),
    }


def pack_params(p, n_dim):
    """One-time packing: fuse Wq|Wk|Wv, fold the 1/sqrt(n_dim) score scale into Wq/bq,
    store matmul weights in bf16 (MXU operands); keep bias/LN/epilogue params f32."""
    scale = jnp.float32(1.0 / np.sqrt(n_dim))
    m, f = p["mha"], p["ffn"]
    w_qkv = jnp.concatenate([m["wq"] * scale, m["wk"], m["wv"]], axis=1)
    b_qkv = jnp.concatenate([m["bq"] * scale, m["bk"], m["bv"]], axis=0)
    return {
        "emb": p["emb"],
        "pos_emb": p["pos_emb"],
        "w_qkv": w_qkv.astype(jnp.bfloat16),
        "b_qkv": b_qkv.reshape(1, -1).astype(jnp.float32),
        "w_c": m["wc"].astype(jnp.bfloat16),
        "b_c": m["bc"].reshape(1, -1),
        "w1": f["w1"].astype(jnp.bfloat16),
        "b1": f["b1"].reshape(1, -1),
        "w2": f["w2"].astype(jnp.bfloat16),
        "b2": f["b2"].reshape(1, -1),
        "ln_g": p["ln_g"].reshape(1, -1),
        "ln_b": p["ln_b"].reshape(1, -1),
    }


# ------------------------------------ main ------------------------------------

if __name__ == "__main__":
    # small shapes consistent with the module
    vocab_size = 32
    n_dim = 16
    n_head = 4
    n_layers = 1
    batch = 2
    seq_len = 8        # decoder length (== max_len)
    enc_len = 8        # encoder output length
    d_model = n_dim * n_head
    sos_idx = 1        # char_dict.char2idx['SOS']

    key = jax.random.PRNGKey(0)
    k_params, k_tok, k_enc = jax.random.split(key, 3)

    params = init_params(k_params, vocab_size, n_dim, n_head)
    packed = pack_params(params, n_dim)

    input_data = jax.random.randint(k_tok, (batch, seq_len), 2, vocab_size, dtype=jnp.int32)
    encoder_output = jax.random.normal(k_enc, (batch, enc_len, d_model), dtype=jnp.float32)

    fwd = jax.jit(functools.partial(decoder_forward, sos_idx=sos_idx,
                                    n_layers=n_layers, n_head=n_head, n_dim=n_dim))
    out = fwd(packed, input_data, encoder_output)
    out = jax.block_until_ready(out)

    assert out.shape == (batch, seq_len, d_model)
    assert bool(jnp.all(jnp.isfinite(out)))
    # TODO(synk): eval-mode (is_eval=True) branch of Decoder.forward is not implemented.
    print("KERNEL_OK")
</pallas_src>

<mosaic_0001>
module attributes {stable_mosaic.version = 11 : i64} {
  func.func @_ffn_block_kernel(%arg0: i32, %arg1: memref<1x8x64xf32, #tpu.memory_space<vmem>>, %arg2: memref<1x8x64xf32, #tpu.memory_space<vmem>>, %arg3: memref<64x32xbf16, #tpu.memory_space<vmem>>, %arg4: memref<1x32xf32, #tpu.memory_space<vmem>>, %arg5: memref<32x64xbf16, #tpu.memory_space<vmem>>, %arg6: memref<1x64xf32, #tpu.memory_space<vmem>>, %arg7: memref<1x64xf32, #tpu.memory_space<vmem>>, %arg8: memref<1x64xf32, #tpu.memory_space<vmem>>, %arg9: memref<1x8x64xf32, #tpu.memory_space<vmem>>) attributes {dimension_semantics = [#tpu.dimension_semantics<parallel>], iteration_bounds = array<i64: 2>, scalar_prefetch = 0 : i64, scratch_operands = 0 : i64, tpu.core_type = #tpu.core_type<tc>, window_params = [{transform_indices = @transform_0, window_bounds = array<i64: 1, 8, 64>}, {transform_indices = @transform_1, window_bounds = array<i64: 1, 8, 64>}, {pipeline_mode = #tpu.pipeline_mode<synchronous>, transform_indices = @transform_2, window_bounds = array<i64: 64, 32>}, {pipeline_mode = #tpu.pipeline_mode<synchronous>, transform_indices = @transform_3, window_bounds = array<i64: 1, 32>}, {pipeline_mode = #tpu.pipeline_mode<synchronous>, transform_indices = @transform_4, window_bounds = array<i64: 32, 64>}, {pipeline_mode = #tpu.pipeline_mode<synchronous>, transform_indices = @transform_5, window_bounds = array<i64: 1, 64>}, {pipeline_mode = #tpu.pipeline_mode<synchronous>, transform_indices = @transform_6, window_bounds = array<i64: 1, 64>}, {pipeline_mode = #tpu.pipeline_mode<synchronous>, transform_indices = @transform_7, window_bounds = array<i64: 1, 64>}, {transform_indices = @transform_8, window_bounds = array<i64: 1, 8, 64>}]} {
    %c0 = arith.constant 0 : index
    %c0_0 = arith.constant 0 : index
    %c0_1 = arith.constant 0 : index
    %0 = vector.load %arg1[%c0, %c0_0, %c0_1] : memref<1x8x64xf32, #tpu.memory_space<vmem>>, vector<1x8x64xf32>
    %1 = vector.shape_cast %0 : vector<1x8x64xf32> to vector<8x64xf32>
    %2 = arith.truncf %1 : vector<8x64xf32> to vector<8x64xbf16>
    %c0_2 = arith.constant 0 : index
    %c0_3 = arith.constant 0 : index
    %3 = vector.load %arg3[%c0_2, %c0_3] : memref<64x32xbf16, #tpu.memory_space<vmem>>, vector<64x32xbf16>
    %cst = arith.constant dense<0.000000e+00> : vector<8x32xf32>
    %4 = tpu.matmul %2, %3, %cst {dimension_numbers = #tpu.dot_dimension_numbers<[1], [0], [0], [1], [0, 0, 1, 1], [], []>} : vector<8x64xbf16>, vector<64x32xbf16>, vector<8x32xf32> -> vector<8x32xf32>
    %c0_4 = arith.constant 0 : index
    %c0_5 = arith.constant 0 : index
    %5 = vector.load %arg4[%c0_4, %c0_5] : memref<1x32xf32, #tpu.memory_space<vmem>>, vector<1x32xf32>
    %6 = vector.broadcast %5 : vector<1x32xf32> to vector<8x32xf32>
    %7 = arith.addf %4, %6 : vector<8x32xf32>
    %cst_6 = arith.constant 0.000000e+00 : f32
    %8 = vector.broadcast %cst_6 : f32 to vector<8x32xf32>
    %9 = arith.maximumf %7, %8 : vector<8x32xf32>
    %10 = arith.truncf %9 : vector<8x32xf32> to vector<8x32xbf16>
    %c0_7 = arith.constant 0 : index
    %c0_8 = arith.constant 0 : index
    %11 = vector.load %arg5[%c0_7, %c0_8] : memref<32x64xbf16, #tpu.memory_space<vmem>>, vector<32x64xbf16>
    %cst_9 = arith.constant dense<0.000000e+00> : vector<8x64xf32>
    %12 = tpu.matmul %10, %11, %cst_9 {dimension_numbers = #tpu.dot_dimension_numbers<[1], [0], [0], [1], [0, 0, 1, 1], [], []>} : vector<8x32xbf16>, vector<32x64xbf16>, vector<8x64xf32> -> vector<8x64xf32>
    %c0_10 = arith.constant 0 : index
    %c0_11 = arith.constant 0 : index
    %13 = vector.load %arg6[%c0_10, %c0_11] : memref<1x64xf32, #tpu.memory_space<vmem>>, vector<1x64xf32>
    %14 = vector.broadcast %13 : vector<1x64xf32> to vector<8x64xf32>
    %15 = arith.addf %12, %14 : vector<8x64xf32>
    %c0_12 = arith.constant 0 : index
    %c0_13 = arith.constant 0 : index
    %c0_14 = arith.constant 0 : index
    %16 = vector.load %arg2[%c0_12, %c0_13, %c0_14] : memref<1x8x64xf32, #tpu.memory_space<vmem>>, vector<1x8x64xf32>
    %17 = vector.shape_cast %16 : vector<1x8x64xf32> to vector<8x64xf32>
    %18 = arith.addf %15, %17 : vector<8x64xf32>
    %cst_15 = arith.constant dense<0.000000e+00> : vector<8xf32>
    %19 = vector.multi_reduction <add>, %18, %cst_15 [1] : vector<8x64xf32> to vector<8xf32>
    %20 = vector.shape_cast %19 : vector<8xf32> to vector<8x1xf32>
    %cst_16 = arith.constant 6.400000e+01 : f32
    %21 = vector.broadcast %cst_16 : f32 to vector<8x1xf32>
    %22 = arith.divf %20, %21 : vector<8x1xf32>
    %23 = vector.broadcast %22 : vector<8x1xf32> to vector<8x64xf32>
    %24 = arith.subf %18, %23 : vector<8x64xf32>
    %25 = arith.mulf %24, %24 : vector<8x64xf32>
    %cst_17 = arith.constant dense<0.000000e+00> : vector<8xf32>
    %26 = vector.multi_reduction <add>, %25, %cst_17 [1] : vector<8x64xf32> to vector<8xf32>
    %27 = vector.shape_cast %26 : vector<8xf32> to vector<8x1xf32>
    %cst_18 = arith.constant 6.400000e+01 : f32
    %28 = vector.broadcast %cst_18 : f32 to vector<8x1xf32>
    %29 = arith.divf %27, %28 : vector<8x1xf32>
    %30 = vector.broadcast %22 : vector<8x1xf32> to vector<8x64xf32>
    %31 = arith.subf %18, %30 : vector<8x64xf32>
    %cst_19 = arith.constant 9.99999974E-6 : f32
    %32 = vector.broadcast %cst_19 : f32 to vector<8x1xf32>
    %33 = arith.addf %29, %32 : vector<8x1xf32>
    %34 = math.rsqrt %33 : vector<8x1xf32>
    %35 = vector.broadcast %34 : vector<8x1xf32> to vector<8x64xf32>
    %36 = arith.mulf %31, %35 : vector<8x64xf32>
    %c0_20 = arith.constant 0 : index
    %c0_21 = arith.constant 0 : index
    %37 = vector.load %arg7[%c0_20, %c0_21] : memref<1x64xf32, #tpu.memory_space<vmem>>, vector<1x64xf32>
    %38 = vector.broadcast %37 : vector<1x64xf32> to vector<8x64xf32>
    %39 = arith.mulf %36, %38 : vector<8x64xf32>
    %c0_22 = arith.constant 0 : index
    %c0_23 = arith.constant 0 : index
    %40 = vector.load %arg8[%c0_22, %c0_23] : memref<1x64xf32, #tpu.memory_space<vmem>>, vector<1x64xf32>
    %41 = vector.broadcast %40 : vector<1x64xf32> to vector<8x64xf32>
    %42 = arith.addf %39, %41 : vector<8x64xf32>
    %c0_24 = arith.constant 0 : index
    %c0_25 = arith.constant 0 : index
    %c0_26 = arith.constant 0 : index
    %43 = vector.load %arg9[%c0_24, %c0_25, %c0_26] : memref<1x8x64xf32, #tpu.memory_space<vmem>>, vector<1x8x64xf32>
    %44 = vector.shape_cast %43 : vector<1x8x64xf32> to vector<8x64xf32>
    %45 = vector.shape_cast %42 : vector<8x64xf32> to vector<1x8x64xf32>
    tpu.vector_store %arg9[%c0_24, %c0_25, %c0_26], %45 {strides = array<i32>} : memref<1x8x64xf32, #tpu.memory_space<vmem>>, vector<1x8x64xf32>,
    return
  }
  func.func @transform_0(%arg0: i32) -> (i32, i32, i32) {
    %c0_i32 = arith.constant 0 : i32
    %c0_i32_0 = arith.constant 0 : i32
    %c0_i32_1 = arith.constant 0 : i32
    return %arg0, %c0_i32, %c0_i32_0 : i32, i32, i32
  }
  func.func @transform_1(%arg0: i32) -> (i32, i32, i32) {
    %c0_i32 = arith.constant 0 : i32
    %c0_i32_0 = arith.constant 0 : i32
    %c0_i32_1 = arith.constant 0 : i32
    return %arg0, %c0_i32, %c0_i32_0 : i32, i32, i32
  }
  func.func @transform_2(%arg0: i32) -> (i32, i32) {
    %c0_i32 = arith.constant 0 : i32
    %c0_i32_0 = arith.constant 0 : i32
    %c0_i32_1 = arith.constant 0 : i32
    return %c0_i32, %c0_i32_0 : i32, i32
  }
  func.func @transform_3(%arg0: i32) -> (i32, i32) {
    %c0_i32 = arith.constant 0 : i32
    %c0_i32_0 = arith.constant 0 : i32
    %c0_i32_1 = arith.constant 0 : i32
    return %c0_i32, %c0_i32_0 : i32, i32
  }
  func.func @transform_4(%arg0: i32) -> (i32, i32) {
    %c0_i32 = arith.constant 0 : i32
    %c0_i32_0 = arith.constant 0 : i32
    %c0_i32_1 = arith.constant 0 : i32
    return %c0_i32, %c0_i32_0 : i32, i32
  }
  func.func @transform_5(%arg0: i32) -> (i32, i32) {
    %c0_i32 = arith.constant 0 : i32
    %c0_i32_0 = arith.constant 0 : i32
    %c0_i32_1 = arith.constant 0 : i32
    return %c0_i32, %c0_i32_0 : i32, i32
  }
  func.func @transform_6(%arg0: i32) -> (i32, i32) {
    %c0_i32 = arith.constant 0 : i32
    %c0_i32_0 = arith.constant 0 : i32
    %c0_i32_1 = arith.constant 0 : i32
    return %c0_i32, %c0_i32_0 : i32, i32
  }
  func.func @transform_7(%arg0: i32) -> (i32, i32) {
    %c0_i32 = arith.constant 0 : i32
    %c0_i32_0 = arith.constant 0 : i32
    %c0_i32_1 = arith.constant 0 : i32
    return %c0_i32, %c0_i32_0 : i32, i32
  }
  func.func @transform_8(%arg0: i32) -> (i32, i32, i32) {
    %c0_i32 = arith.constant 0 : i32
    %c0_i32_0 = arith.constant 0 : i32
    %c0_i32_1 = arith.constant 0 : i32
    return %arg0, %c0_i32, %c0_i32_0 : i32, i32, i32
  }
}

module attributes {stable_mosaic.version = 11 : i64} {
  func.func @_mha_block_kernel(%arg0: i32, %arg1: memref<1x8x64xf32, #tpu.memory_space<vmem>>, %arg2: memref<1x8x64xf32, #tpu.memory_space<vmem>>, %arg3: memref<64x192xbf16, #tpu.memory_space<vmem>>, %arg4: memref<1x192xf32, #tpu.memory_space<vmem>>, %arg5: memref<64x64xbf16, #tpu.memory_space<vmem>>, %arg6: memref<1x64xf32, #tpu.memory_space<vmem>>, %arg7: memref<1x64xf32, #tpu.memory_space<vmem>>, %arg8: memref<1x64xf32, #tpu.memory_space<vmem>>, %arg9: memref<1x8x64xf32, #tpu.memory_space<vmem>>, %arg10: memref<1x8x64xf32, #tpu.memory_space<vmem>>) attributes {dimension_semantics = [#tpu.dimension_semantics<parallel>], iteration_bounds = array<i64: 2>, scalar_prefetch = 0 : i64, scratch_operands = 0 : i64, tpu.core_type = #tpu.core_type<tc>, window_params = [{transform_indices = @transform_0, window_bounds = array<i64: 1, 8, 64>}, {transform_indices = @transform_1, window_bounds = array<i64: 1, 8, 64>}, {pipeline_mode = #tpu.pipeline_mode<synchronous>, transform_indices = @transform_2, window_bounds = array<i64: 64, 192>}, {pipeline_mode = #tpu.pipeline_mode<synchronous>, transform_indices = @transform_3, window_bounds = array<i64: 1, 192>}, {pipeline_mode = #tpu.pipeline_mode<synchronous>, transform_indices = @transform_4, window_bounds = array<i64: 64, 64>}, {pipeline_mode = #tpu.pipeline_mode<synchronous>, transform_indices = @transform_5, window_bounds = array<i64: 1, 64>}, {pipeline_mode = #tpu.pipeline_mode<synchronous>, transform_indices = @transform_6, window_bounds = array<i64: 1, 64>}, {pipeline_mode = #tpu.pipeline_mode<synchronous>, transform_indices = @transform_7, window_bounds = array<i64: 1, 64>}, {transform_indices = @transform_8, window_bounds = array<i64: 1, 8, 64>}, {transform_indices = @transform_9, window_bounds = array<i64: 1, 8, 64>}]} {
    %c0 = arith.constant 0 : index
    %c0_0 = arith.constant 0 : index
    %c0_1 = arith.constant 0 : index
    %0 = vector.load %arg1[%c0, %c0_0, %c0_1] : memref<1x8x64xf32, #tpu.memory_space<vmem>>, vector<1x8x64xf32>
    %1 = vector.shape_cast %0 : vector<1x8x64xf32> to vector<8x64xf32>
    %2 = arith.truncf %1 : vector<8x64xf32> to vector<8x64xbf16>
    %c0_2 = arith.constant 0 : index
    %c0_3 = arith.constant 0 : index
    %3 = vector.load %arg3[%c0_2, %c0_3] : memref<64x192xbf16, #tpu.memory_space<vmem>>, vector<64x192xbf16>
    %c0_4 = arith.constant 0 : index
    %c0_5 = arith.constant 0 : index
    %4 = vector.load %arg4[%c0_4, %c0_5] : memref<1x192xf32, #tpu.memory_space<vmem>>, vector<1x192xf32>
    %cst = arith.constant dense<0.000000e+00> : vector<8x192xf32>
    %5 = tpu.matmul %2, %3, %cst {dimension_numbers = #tpu.dot_dimension_numbers<[1], [0], [0], [1], [0, 0, 1, 1], [], []>} : vector<8x64xbf16>, vector<64x192xbf16>, vector<8x192xf32> -> vector<8x192xf32>
    %6 = vector.broadcast %4 : vector<1x192xf32> to vector<8x192xf32>
    %7 = arith.addf %5, %6 : vector<8x192xf32>
    %8 = vector.extract_strided_slice %7 {offsets = [0, 0], sizes = [8, 64], strides = [1, 1]} : vector<8x192xf32> to vector<8x64xf32>
    %9 = vector.extract_strided_slice %7 {offsets = [0, 64], sizes = [8, 64], strides = [1, 1]} : vector<8x192xf32> to vector<8x64xf32>
    %10 = vector.extract_strided_slice %7 {offsets = [0, 128], sizes = [8, 64], strides = [1, 1]} : vector<8x192xf32> to vector<8x64xf32>
    %11 = tpu.iota {dimensions = array<i32: 0>} : vector<8x8xi32>
    %12 = tpu.iota {dimensions = array<i32: 1>} : vector<8x8xi32>
    %13 = arith.cmpi sgt, %12, %11 : vector<8x8xi32>
    %14 = vector.extract_strided_slice %8 {offsets = [0, 0], sizes = [8, 16], strides = [1, 1]} : vector<8x64xf32> to vector<8x16xf32>
    %15 = arith.truncf %14 : vector<8x16xf32> to vector<8x16xbf16>
    %16 = vector.extract_strided_slice %9 {offsets = [0, 0], sizes = [8, 16], strides = [1, 1]} : vector<8x64xf32> to vector<8x16xf32>
    %17 = arith.truncf %16 : vector<8x16xf32> to vector<8x16xbf16>
    %18 = vector.extract_strided_slice %10 {offsets = [0, 0], sizes = [8, 16], strides = [1, 1]} : vector<8x64xf32> to vector<8x16xf32>
    %19 = arith.truncf %18 : vector<8x16xf32> to vector<8x16xbf16>
    %cst_6 = arith.constant dense<0.000000e+00> : vector<8x8xf32>
    %20 = tpu.matmul %15, %17, %cst_6 {dimension_numbers = #tpu.dot_dimension_numbers<[1], [1], [0], [0], [0, 0, 1, 0], [], []>} : vector<8x16xbf16>, vector<8x16xbf16>, vector<8x8xf32> -> vector<8x8xf32>
    %cst_7 = arith.constant -1.000000e+09 : f32
    %21 = vector.broadcast %cst_7 : f32 to vector<8x8xf32>
    %22 = arith.select %13, %21, %20 : vector<8x8xi1>, vector<8x8xf32>
    %cst_8 = arith.constant dense<0xFF800000> : vector<8xf32>
    %23 = vector.multi_reduction <maximumf>, %22, %cst_8 [1] : vector<8x8xf32> to vector<8xf32>
    %24 = vector.shape_cast %23 : vector<8xf32> to vector<8x1xf32>
    %25 = vector.broadcast %24 : vector<8x1xf32> to vector<8x8xf32>
    %26 = arith.subf %22, %25 : vector<8x8xf32>
    %27 = math.exp %26 : vector<8x8xf32>
    %cst_9 = arith.constant dense<0.000000e+00> : vector<8xf32>
    %28 = vector.multi_reduction <add>, %27, %cst_9 [1] : vector<8x8xf32> to vector<8xf32>
    %29 = vector.shape_cast %28 : vector<8xf32> to vector<8x1xf32>
    %30 = tpu.reciprocal %29 {approx = true} : vector<8x1xf32> -> vector<8x1xf32>
    %31 = vector.broadcast %30 : vector<8x1xf32> to vector<8x8xf32>
    %32 = arith.mulf %27, %31 : vector<8x8xf32>
    %33 = arith.truncf %32 : vector<8x8xf32> to vector<8x8xbf16>
    %cst_10 = arith.constant dense<0.000000e+00> : vector<8x16xf32>
    %34 = tpu.matmul %33, %19, %cst_10 {dimension_numbers = #tpu.dot_dimension_numbers<[1], [0], [0], [1], [0, 0, 1, 1], [], []>} : vector<8x8xbf16>, vector<8x16xbf16>, vector<8x16xf32> -> vector<8x16xf32>
    %35 = vector.extract_strided_slice %8 {offsets = [0, 16], sizes = [8, 16], strides = [1, 1]} : vector<8x64xf32> to vector<8x16xf32>
    %36 = arith.truncf %35 : vector<8x16xf32> to vector<8x16xbf16>
    %37 = vector.extract_strided_slice %9 {offsets = [0, 16], sizes = [8, 16], strides = [1, 1]} : vector<8x64xf32> to vector<8x16xf32>
    %38 = arith.truncf %37 : vector<8x16xf32> to vector<8x16xbf16>
    %39 = vector.extract_strided_slice %10 {offsets = [0, 16], sizes = [8, 16], strides = [1, 1]} : vector<8x64xf32> to vector<8x16xf32>
    %40 = arith.truncf %39 : vector<8x16xf32> to vector<8x16xbf16>
    %cst_11 = arith.constant dense<0.000000e+00> : vector<8x8xf32>
    %41 = tpu.matmul %36, %38, %cst_11 {dimension_numbers = #tpu.dot_dimension_numbers<[1], [1], [0], [0], [0, 0, 1, 0], [], []>} : vector<8x16xbf16>, vector<8x16xbf16>, vector<8x8xf32> -> vector<8x8xf32>
    %cst_12 = arith.constant -1.000000e+09 : f32
    %42 = vector.broadcast %cst_12 : f32 to vector<8x8xf32>
    %43 = arith.select %13, %42, %41 : vector<8x8xi1>, vector<8x8xf32>
    %cst_13 = arith.constant dense<0xFF800000> : vector<8xf32>
    %44 = vector.multi_reduction <maximumf>, %43, %cst_13 [1] : vector<8x8xf32> to vector<8xf32>
    %45 = vector.shape_cast %44 : vector<8xf32> to vector<8x1xf32>
    %46 = vector.broadcast %45 : vector<8x1xf32> to vector<8x8xf32>
    %47 = arith.subf %43, %46 : vector<8x8xf32>
    %48 = math.exp %47 : vector<8x8xf32>
    %cst_14 = arith.constant dense<0.000000e+00> : vector<8xf32>
    %49 = vector.multi_reduction <add>, %48, %cst_14 [1] : vector<8x8xf32> to vector<8xf32>
    %50 = vector.shape_cast %49 : vector<8xf32> to vector<8x1xf32>
    %51 = tpu.reciprocal %50 {approx = true} : vector<8x1xf32> -> vector<8x1xf32>
    %52 = vector.broadcast %51 : vector<8x1xf32> to vector<8x8xf32>
    %53 = arith.mulf %48, %52 : vector<8x8xf32>
    %54 = arith.truncf %53 : vector<8x8xf32> to vector<8x8xbf16>
    %cst_15 = arith.constant dense<0.000000e+00> : vector<8x16xf32>
    %55 = tpu.matmul %54, %40, %cst_15 {dimension_numbers = #tpu.dot_dimension_numbers<[1], [0], [0], [1], [0, 0, 1, 1], [], []>} : vector<8x8xbf16>, vector<8x16xbf16>, vector<8x16xf32> -> vector<8x16xf32>
    %56 = vector.extract_strided_slice %8 {offsets = [0, 32], sizes = [8, 16], strides = [1, 1]} : vector<8x64xf32> to vector<8x16xf32>
    %57 = arith.truncf %56 : vector<8x16xf32> to vector<8x16xbf16>
    %58 = vector.extract_strided_slice %9 {offsets = [0, 32], sizes = [8, 16], strides = [1, 1]} : vector<8x64xf32> to vector<8x16xf32>
    %59 = arith.truncf %58 : vector<8x16xf32> to vector<8x16xbf16>
    %60 = vector.extract_strided_slice %10 {offsets = [0, 32], sizes = [8, 16], strides = [1, 1]} : vector<8x64xf32> to vector<8x16xf32>
    %61 = arith.truncf %60 : vector<8x16xf32> to vector<8x16xbf16>
    %cst_16 = arith.constant dense<0.000000e+00> : vector<8x8xf32>
    %62 = tpu.matmul %57, %59, %cst_16 {dimension_numbers = #tpu.dot_dimension_numbers<[1], [1], [0], [0], [0, 0, 1, 0], [], []>} : vector<8x16xbf16>, vector<8x16xbf16>, vector<8x8xf32> -> vector<8x8xf32>
    %cst_17 = arith.constant -1.000000e+09 : f32
    %63 = vector.broadcast %cst_17 : f32 to vector<8x8xf32>
    %64 = arith.select %13, %63, %62 : vector<8x8xi1>, vector<8x8xf32>
    %cst_18 = arith.constant dense<0xFF800000> : vector<8xf32>
    %65 = vector.multi_reduction <maximumf>, %64, %cst_18 [1] : vector<8x8xf32> to vector<8xf32>
    %66 = vector.shape_cast %65 : vector<8xf32> to vector<8x1xf32>
    %67 = vector.broadcast %66 : vector<8x1xf32> to vector<8x8xf32>
    %68 = arith.subf %64, %67 : vector<8x8xf32>
    %69 = math.exp %68 : vector<8x8xf32>
    %cst_19 = arith.constant dense<0.000000e+00> : vector<8xf32>
    %70 = vector.multi_reduction <add>, %69, %cst_19 [1] : vector<8x8xf32> to vector<8xf32>
    %71 = vector.shape_cast %70 : vector<8xf32> to vector<8x1xf32>
    %72 = tpu.reciprocal %71 {approx = true} : vector<8x1xf32> -> vector<8x1xf32>
    %73 = vector.broadcast %72 : vector<8x1xf32> to vector<8x8xf32>
    %74 = arith.mulf %69, %73 : vector<8x8xf32>
    %75 = arith.truncf %74 : vector<8x8xf32> to vector<8x8xbf16>
    %cst_20 = arith.constant dense<0.000000e+00> : vector<8x16xf32>
    %76 = tpu.matmul %75, %61, %cst_20 {dimension_numbers = #tpu.dot_dimension_numbers<[1], [0], [0], [1], [0, 0, 1, 1], [], []>} : vector<8x8xbf16>, vector<8x16xbf16>, vector<8x16xf32> -> vector<8x16xf32>
    %77 = vector.extract_strided_slice %8 {offsets = [0, 48], sizes = [8, 16], strides = [1, 1]} : vector<8x64xf32> to vector<8x16xf32>
    %78 = arith.truncf %77 : vector<8x16xf32> to vector<8x16xbf16>
    %79 = vector.extract_strided_slice %9 {offsets = [0, 48], sizes = [8, 16], strides = [1, 1]} : vector<8x64xf32> to vector<8x16xf32>
    %80 = arith.truncf %79 : vector<8x16xf32> to vector<8x16xbf16>
    %81 = vector.extract_strided_slice %10 {offsets = [0, 48], sizes = [8, 16], strides = [1, 1]} : vector<8x64xf32> to vector<8x16xf32>
    %82 = arith.truncf %81 : vector<8x16xf32> to vector<8x16xbf16>
    %cst_21 = arith.constant dense<0.000000e+00> : vector<8x8xf32>
    %83 = tpu.matmul %78, %80, %cst_21 {dimension_numbers = #tpu.dot_dimension_numbers<[1], [1], [0], [0], [0, 0, 1, 0], [], []>} : vector<8x16xbf16>, vector<8x16xbf16>, vector<8x8xf32> -> vector<8x8xf32>
    %cst_22 = arith.constant -1.000000e+09 : f32
    %84 = vector.broadcast %cst_22 : f32 to vector<8x8xf32>
    %85 = arith.select %13, %84, %83 : vector<8x8xi1>, vector<8x8xf32>
    %cst_23 = arith.constant dense<0xFF800000> : vector<8xf32>
    %86 = vector.multi_reduction <maximumf>, %85, %cst_23 [1] : vector<8x8xf32> to vector<8xf32>
    %87 = vector.shape_cast %86 : vector<8xf32> to vector<8x1xf32>
    %88 = vector.broadcast %87 : vector<8x1xf32> to vector<8x8xf32>
    %89 = arith.subf %85, %88 : vector<8x8xf32>
    %90 = math.exp %89 : vector<8x8xf32>
    %cst_24 = arith.constant dense<0.000000e+00> : vector<8xf32>
    %91 = vector.multi_reduction <add>, %90, %cst_24 [1] : vector<8x8xf32> to vector<8xf32>
    %92 = vector.shape_cast %91 : vector<8xf32> to vector<8x1xf32>
    %93 = tpu.reciprocal %92 {approx = true} : vector<8x1xf32> -> vector<8x1xf32>
    %94 = vector.broadcast %93 : vector<8x1xf32> to vector<8x8xf32>
    %95 = arith.mulf %90, %94 : vector<8x8xf32>
    %96 = arith.truncf %95 : vector<8x8xf32> to vector<8x8xbf16>
    %cst_25 = arith.constant dense<0.000000e+00> : vector<8x16xf32>
    %97 = tpu.matmul %96, %82, %cst_25 {dimension_numbers = #tpu.dot_dimension_numbers<[1], [0], [0], [1], [0, 0, 1, 1], [], []>} : vector<8x8xbf16>, vector<8x16xbf16>, vector<8x16xf32> -> vector<8x16xf32>
    %98 = tpu.concatenate %34, %55, %76, %97 in 1 : vector<8x16xf32>, vector<8x16xf32>, vector<8x16xf32>, vector<8x16xf32> -> vector<8x64xf32>
    %99 = arith.truncf %98 : vector<8x64xf32> to vector<8x64xbf16>
    %c0_26 = arith.constant 0 : index
    %c0_27 = arith.constant 0 : index
    %100 = vector.load %arg5[%c0_26, %c0_27] : memref<64x64xbf16, #tpu.memory_space<vmem>>, vector<64x64xbf16>
    %cst_28 = arith.constant dense<0.000000e+00> : vector<8x64xf32>
    %101 = tpu.matmul %99, %100, %cst_28 {dimension_numbers = #tpu.dot_dimension_numbers<[1], [0], [0], [1], [0, 0, 1, 1], [], []>} : vector<8x64xbf16>, vector<64x64xbf16>, vector<8x64xf32> -> vector<8x64xf32>
    %c0_29 = arith.constant 0 : index
    %c0_30 = arith.constant 0 : index
    %102 = vector.load %arg6[%c0_29, %c0_30] : memref<1x64xf32, #tpu.memory_space<vmem>>, vector<1x64xf32>
    %103 = vector.broadcast %102 : vector<1x64xf32> to vector<8x64xf32>
    %104 = arith.addf %101, %103 : vector<8x64xf32>
    %c0_31 = arith.constant 0 : index
    %c0_32 = arith.constant 0 : index
    %c0_33 = arith.constant 0 : index
    %105 = vector.load %arg9[%c0_31, %c0_32, %c0_33] : memref<1x8x64xf32, #tpu.memory_space<vmem>>, vector<1x8x64xf32>
    %106 = vector.shape_cast %105 : vector<1x8x64xf32> to vector<8x64xf32>
    %107 = vector.shape_cast %104 : vector<8x64xf32> to vector<1x8x64xf32>
    tpu.vector_store %arg9[%c0_31, %c0_32, %c0_33], %107 {strides = array<i32>} : memref<1x8x64xf32, #tpu.memory_space<vmem>>, vector<1x8x64xf32>,
    %108 = arith.addf %104, %1 : vector<8x64xf32>
    %cst_34 = arith.constant dense<0.000000e+00> : vector<8xf32>
    %109 = vector.multi_reduction <add>, %108, %cst_34 [1] : vector<8x64xf32> to vector<8xf32>
    %110 = vector.shape_cast %109 : vector<8xf32> to vector<8x1xf32>
    %cst_35 = arith.constant 6.400000e+01 : f32
    %111 = vector.broadcast %cst_35 : f32 to vector<8x1xf32>
    %112 = arith.divf %110, %111 : vector<8x1xf32>
    %113 = vector.broadcast %112 : vector<8x1xf32> to vector<8x64xf32>
    %114 = arith.subf %108, %113 : vector<8x64xf32>
    %115 = arith.mulf %114, %114 : vector<8x64xf32>
    %cst_36 = arith.constant dense<0.000000e+00> : vector<8xf32>
    %116 = vector.multi_reduction <add>, %115, %cst_36 [1] : vector<8x64xf32> to vector<8xf32>
    %117 = vector.shape_cast %116 : vector<8xf32> to vector<8x1xf32>
    %cst_37 = arith.constant 6.400000e+01 : f32
    %118 = vector.broadcast %cst_37 : f32 to vector<8x1xf32>
    %119 = arith.divf %117, %118 : vector<8x1xf32>
    %120 = vector.broadcast %112 : vector<8x1xf32> to vector<8x64xf32>
    %121 = arith.subf %108, %120 : vector<8x64xf32>
    %cst_38 = arith.constant 9.99999974E-6 : f32
    %122 = vector.broadcast %cst_38 : f32 to vector<8x1xf32>
    %123 = arith.addf %119, %122 : vector<8x1xf32>
    %124 = math.rsqrt %123 : vector<8x1xf32>
    %125 = vector.broadcast %124 : vector<8x1xf32> to vector<8x64xf32>
    %126 = arith.mulf %121, %125 : vector<8x64xf32>
    %c0_39 = arith.constant 0 : index
    %c0_40 = arith.constant 0 : index
    %127 = vector.load %arg7[%c0_39, %c0_40] : memref<1x64xf32, #tpu.memory_space<vmem>>, vector<1x64xf32>
    %128 = vector.broadcast %127 : vector<1x64xf32> to vector<8x64xf32>
    %129 = arith.mulf %126, %128 : vector<8x64xf32>
    %c0_41 = arith.constant 0 : index
    %c0_42 = arith.constant 0 : index
    %130 = vector.load %arg8[%c0_41, %c0_42] : memref<1x64xf32, #tpu.memory_space<vmem>>, vector<1x64xf32>
    %131 = vector.broadcast %130 : vector<1x64xf32> to vector<8x64xf32>
    %132 = arith.addf %129, %131 : vector<8x64xf32>
    %c0_43 = arith.constant 0 : index
    %c0_44 = arith.constant 0 : index
    %c0_45 = arith.constant 0 : index
    %133 = vector.load %arg10[%c0_43, %c0_44, %c0_45] : memref<1x8x64xf32, #tpu.memory_space<vmem>>, vector<1x8x64xf32>
    %134 = vector.shape_cast %133 : vector<1x8x64xf32> to vector<8x64xf32>
    %135 = vector.shape_cast %132 : vector<8x64xf32> to vector<1x8x64xf32>
    tpu.vector_store %arg10[%c0_43, %c0_44, %c0_45], %135 {strides = array<i32>} : memref<1x8x64xf32, #tpu.memory_space<vmem>>, vector<1x8x64xf32>,
    return
  }
  func.func @transform_0(%arg0: i32) -> (i32, i32, i32) {
    %c0_i32 = arith.constant 0 : i32
    %c0_i32_0 = arith.constant 0 : i32
    %c0_i32_1 = arith.constant 0 : i32
    return %arg0, %c0_i32, %c0_i32_0 : i32, i32, i32
  }
  func.func @transform_1(%arg0: i32) -> (i32, i32, i32) {
    %c0_i32 = arith.constant 0 : i32
    %c0_i32_0 = arith.constant 0 : i32
    %c0_i32_1 = arith.constant 0 : i32
    return %arg0, %c0_i32, %c0_i32_0 : i32, i32, i32
  }
  func.func @transform_2(%arg0: i32) -> (i32, i32) {
    %c0_i32 = arith.constant 0 : i32
    %c0_i32_0 = arith.constant 0 : i32
    %c0_i32_1 = arith.constant 0 : i32
    return %c0_i32, %c0_i32_0 : i32, i32
  }
  func.func @transform_3(%arg0: i32) -> (i32, i32) {
    %c0_i32 = arith.constant 0 : i32
    %c0_i32_0 = arith.constant 0 : i32
    %c0_i32_1 = arith.constant 0 : i32
    return %c0_i32, %c0_i32_0 : i32, i32
  }
  func.func @transform_4(%arg0: i32) -> (i32, i32) {
    %c0_i32 = arith.constant 0 : i32
    %c0_i32_0 = arith.constant 0 : i32
    %c0_i32_1 = arith.constant 0 : i32
    return %c0_i32, %c0_i32_0 : i32, i32
  }
  func.func @transform_5(%arg0: i32) -> (i32, i32) {
    %c0_i32 = arith.constant 0 : i32
    %c0_i32_0 = arith.constant 0 : i32
    %c0_i32_1 = arith.constant 0 : i32
    return %c0_i32, %c0_i32_0 : i32, i32
  }
  func.func @transform_6(%arg0: i32) -> (i32, i32) {
    %c0_i32 = arith.constant 0 : i32
    %c0_i32_0 = arith.constant 0 : i32
    %c0_i32_1 = arith.constant 0 : i32
    return %c0_i32, %c0_i32_0 : i32, i32
  }
  func.func @transform_7(%arg0: i32) -> (i32, i32) {
    %c0_i32 = arith.constant 0 : i32
    %c0_i32_0 = arith.constant 0 : i32
    %c0_i32_1 = arith.constant 0 : i32
    return %c0_i32, %c0_i32_0 : i32, i32
  }
  func.func @transform_8(%arg0: i32) -> (i32, i32, i32) {
    %c0_i32 = arith.constant 0 : i32
    %c0_i32_0 = arith.constant 0 : i32
    %c0_i32_1 = arith.constant 0 : i32
    return %arg0, %c0_i32, %c0_i32_0 : i32, i32, i32
  }
  func.func @transform_9(%arg0: i32) -> (i32, i32, i32) {
    %c0_i32 = arith.constant 0 : i32
    %c0_i32_0 = arith.constant 0 : i32
    %c0_i32_1 = arith.constant 0 : i32
    return %arg0, %c0_i32, %c0_i32_0 : i32, i32, i32
  }
}

module attributes {stable_mosaic.version = 11 : i64} {
  func.func @_mha_block_kernel(%arg0: i32, %arg1: memref<1x8x64xf32, #tpu.memory_space<vmem>>, %arg2: memref<1x8x64xf32, #tpu.memory_space<vmem>>, %arg3: memref<64x192xbf16, #tpu.memory_space<vmem>>, %arg4: memref<1x192xf32, #tpu.memory_space<vmem>>, %arg5: memref<64x64xbf16, #tpu.memory_space<vmem>>, %arg6: memref<1x64xf32, #tpu.memory_space<vmem>>, %arg7: memref<1x64xf32, #tpu.memory_space<vmem>>, %arg8: memref<1x64xf32, #tpu.memory_space<vmem>>, %arg9: memref<1x8x64xf32, #tpu.memory_space<vmem>>, %arg10: memref<1x8x64xf32, #tpu.memory_space<vmem>>) attributes {dimension_semantics = [#tpu.dimension_semantics<parallel>], iteration_bounds = array<i64: 2>, scalar_prefetch = 0 : i64, scratch_operands = 0 : i64, tpu.core_type = #tpu.core_type<tc>, window_params = [{transform_indices = @transform_0, window_bounds = array<i64: 1, 8, 64>}, {transform_indices = @transform_1, window_bounds = array<i64: 1, 8, 64>}, {pipeline_mode = #tpu.pipeline_mode<synchronous>, transform_indices = @transform_2, window_bounds = array<i64: 64, 192>}, {pipeline_mode = #tpu.pipeline_mode<synchronous>, transform_indices = @transform_3, window_bounds = array<i64: 1, 192>}, {pipeline_mode = #tpu.pipeline_mode<synchronous>, transform_indices = @transform_4, window_bounds = array<i64: 64, 64>}, {pipeline_mode = #tpu.pipeline_mode<synchronous>, transform_indices = @transform_5, window_bounds = array<i64: 1, 64>}, {pipeline_mode = #tpu.pipeline_mode<synchronous>, transform_indices = @transform_6, window_bounds = array<i64: 1, 64>}, {pipeline_mode = #tpu.pipeline_mode<synchronous>, transform_indices = @transform_7, window_bounds = array<i64: 1, 64>}, {transform_indices = @transform_8, window_bounds = array<i64: 1, 8, 64>}, {transform_indices = @transform_9, window_bounds = array<i64: 1, 8, 64>}]} {
    %c0 = arith.constant 0 : index
    %c0_0 = arith.constant 0 : index
    %c0_1 = arith.constant 0 : index
    %0 = vector.load %arg1[%c0, %c0_0, %c0_1] : memref<1x8x64xf32, #tpu.memory_space<vmem>>, vector<1x8x64xf32>
    %1 = vector.shape_cast %0 : vector<1x8x64xf32> to vector<8x64xf32>
    %2 = arith.truncf %1 : vector<8x64xf32> to vector<8x64xbf16>
    %c0_2 = arith.constant 0 : index
    %c0_3 = arith.constant 0 : index
    %3 = vector.load %arg3[%c0_2, %c0_3] : memref<64x192xbf16, #tpu.memory_space<vmem>>, vector<64x192xbf16>
    %c0_4 = arith.constant 0 : index
    %c0_5 = arith.constant 0 : index
    %4 = vector.load %arg4[%c0_4, %c0_5] : memref<1x192xf32, #tpu.memory_space<vmem>>, vector<1x192xf32>
    %c0_6 = arith.constant 0 : index
    %c0_7 = arith.constant 0 : index
    %c0_8 = arith.constant 0 : index
    %5 = vector.load %arg2[%c0_6, %c0_7, %c0_8] : memref<1x8x64xf32, #tpu.memory_space<vmem>>, vector<1x8x64xf32>
    %6 = vector.shape_cast %5 : vector<1x8x64xf32> to vector<8x64xf32>
    %7 = arith.truncf %6 : vector<8x64xf32> to vector<8x64xbf16>
    %8 = vector.extract_strided_slice %3 {offsets = [0, 0], sizes = [64, 64], strides = [1, 1]} : vector<64x192xbf16> to vector<64x64xbf16>
    %cst = arith.constant dense<0.000000e+00> : vector<8x64xf32>
    %9 = tpu.matmul %2, %8, %cst {dimension_numbers = #tpu.dot_dimension_numbers<[1], [0], [0], [1], [0, 0, 1, 1], [], []>} : vector<8x64xbf16>, vector<64x64xbf16>, vector<8x64xf32> -> vector<8x64xf32>
    %10 = vector.extract_strided_slice %4 {offsets = [0, 0], sizes = [1, 64], strides = [1, 1]} : vector<1x192xf32> to vector<1x64xf32>
    %11 = vector.broadcast %10 : vector<1x64xf32> to vector<8x64xf32>
    %12 = arith.addf %9, %11 : vector<8x64xf32>
    %13 = vector.extract_strided_slice %3 {offsets = [0, 64], sizes = [64, 128], strides = [1, 1]} : vector<64x192xbf16> to vector<64x128xbf16>
    %cst_9 = arith.constant dense<0.000000e+00> : vector<8x128xf32>
    %14 = tpu.matmul %7, %13, %cst_9 {dimension_numbers = #tpu.dot_dimension_numbers<[1], [0], [0], [1], [0, 0, 1, 1], [], []>} : vector<8x64xbf16>, vector<64x128xbf16>, vector<8x128xf32> -> vector<8x128xf32>
    %15 = vector.extract_strided_slice %4 {offsets = [0, 64], sizes = [1, 128], strides = [1, 1]} : vector<1x192xf32> to vector<1x128xf32>
    %16 = vector.broadcast %15 : vector<1x128xf32> to vector<8x128xf32>
    %17 = arith.addf %14, %16 : vector<8x128xf32>
    %18 = vector.extract_strided_slice %17 {offsets = [0, 0], sizes = [8, 64], strides = [1, 1]} : vector<8x128xf32> to vector<8x64xf32>
    %19 = vector.extract_strided_slice %17 {offsets = [0, 64], sizes = [8, 64], strides = [1, 1]} : vector<8x128xf32> to vector<8x64xf32>
    %20 = vector.extract_strided_slice %12 {offsets = [0, 0], sizes = [8, 16], strides = [1, 1]} : vector<8x64xf32> to vector<8x16xf32>
    %21 = arith.truncf %20 : vector<8x16xf32> to vector<8x16xbf16>
    %22 = vector.extract_strided_slice %18 {offsets = [0, 0], sizes = [8, 16], strides = [1, 1]} : vector<8x64xf32> to vector<8x16xf32>
    %23 = arith.truncf %22 : vector<8x16xf32> to vector<8x16xbf16>
    %24 = vector.extract_strided_slice %19 {offsets = [0, 0], sizes = [8, 16], strides = [1, 1]} : vector<8x64xf32> to vector<8x16xf32>
    %25 = arith.truncf %24 : vector<8x16xf32> to vector<8x16xbf16>
    %cst_10 = arith.constant dense<0.000000e+00> : vector<8x8xf32>
    %26 = tpu.matmul %21, %23, %cst_10 {dimension_numbers = #tpu.dot_dimension_numbers<[1], [1], [0], [0], [0, 0, 1, 0], [], []>} : vector<8x16xbf16>, vector<8x16xbf16>, vector<8x8xf32> -> vector<8x8xf32>
    %cst_11 = arith.constant dense<0xFF800000> : vector<8xf32>
    %27 = vector.multi_reduction <maximumf>, %26, %cst_11 [1] : vector<8x8xf32> to vector<8xf32>
    %28 = vector.shape_cast %27 : vector<8xf32> to vector<8x1xf32>
    %29 = vector.broadcast %28 : vector<8x1xf32> to vector<8x8xf32>
    %30 = arith.subf %26, %29 : vector<8x8xf32>
    %31 = math.exp %30 : vector<8x8xf32>
    %cst_12 = arith.constant dense<0.000000e+00> : vector<8xf32>
    %32 = vector.multi_reduction <add>, %31, %cst_12 [1] : vector<8x8xf32> to vector<8xf32>
    %33 = vector.shape_cast %32 : vector<8xf32> to vector<8x1xf32>
    %34 = tpu.reciprocal %33 {approx = true} : vector<8x1xf32> -> vector<8x1xf32>
    %35 = vector.broadcast %34 : vector<8x1xf32> to vector<8x8xf32>
    %36 = arith.mulf %31, %35 : vector<8x8xf32>
    %37 = arith.truncf %36 : vector<8x8xf32> to vector<8x8xbf16>
    %cst_13 = arith.constant dense<0.000000e+00> : vector<8x16xf32>
    %38 = tpu.matmul %37, %25, %cst_13 {dimension_numbers = #tpu.dot_dimension_numbers<[1], [0], [0], [1], [0, 0, 1, 1], [], []>} : vector<8x8xbf16>, vector<8x16xbf16>, vector<8x16xf32> -> vector<8x16xf32>
    %39 = vector.extract_strided_slice %12 {offsets = [0, 16], sizes = [8, 16], strides = [1, 1]} : vector<8x64xf32> to vector<8x16xf32>
    %40 = arith.truncf %39 : vector<8x16xf32> to vector<8x16xbf16>
    %41 = vector.extract_strided_slice %18 {offsets = [0, 16], sizes = [8, 16], strides = [1, 1]} : vector<8x64xf32> to vector<8x16xf32>
    %42 = arith.truncf %41 : vector<8x16xf32> to vector<8x16xbf16>
    %43 = vector.extract_strided_slice %19 {offsets = [0, 16], sizes = [8, 16], strides = [1, 1]} : vector<8x64xf32> to vector<8x16xf32>
    %44 = arith.truncf %43 : vector<8x16xf32> to vector<8x16xbf16>
    %cst_14 = arith.constant dense<0.000000e+00> : vector<8x8xf32>
    %45 = tpu.matmul %40, %42, %cst_14 {dimension_numbers = #tpu.dot_dimension_numbers<[1], [1], [0], [0], [0, 0, 1, 0], [], []>} : vector<8x16xbf16>, vector<8x16xbf16>, vector<8x8xf32> -> vector<8x8xf32>
    %cst_15 = arith.constant dense<0xFF800000> : vector<8xf32>
    %46 = vector.multi_reduction <maximumf>, %45, %cst_15 [1] : vector<8x8xf32> to vector<8xf32>
    %47 = vector.shape_cast %46 : vector<8xf32> to vector<8x1xf32>
    %48 = vector.broadcast %47 : vector<8x1xf32> to vector<8x8xf32>
    %49 = arith.subf %45, %48 : vector<8x8xf32>
    %50 = math.exp %49 : vector<8x8xf32>
    %cst_16 = arith.constant dense<0.000000e+00> : vector<8xf32>
    %51 = vector.multi_reduction <add>, %50, %cst_16 [1] : vector<8x8xf32> to vector<8xf32>
    %52 = vector.shape_cast %51 : vector<8xf32> to vector<8x1xf32>
    %53 = tpu.reciprocal %52 {approx = true} : vector<8x1xf32> -> vector<8x1xf32>
    %54 = vector.broadcast %53 : vector<8x1xf32> to vector<8x8xf32>
    %55 = arith.mulf %50, %54 : vector<8x8xf32>
    %56 = arith.truncf %55 : vector<8x8xf32> to vector<8x8xbf16>
    %cst_17 = arith.constant dense<0.000000e+00> : vector<8x16xf32>
    %57 = tpu.matmul %56, %44, %cst_17 {dimension_numbers = #tpu.dot_dimension_numbers<[1], [0], [0], [1], [0, 0, 1, 1], [], []>} : vector<8x8xbf16>, vector<8x16xbf16>, vector<8x16xf32> -> vector<8x16xf32>
    %58 = vector.extract_strided_slice %12 {offsets = [0, 32], sizes = [8, 16], strides = [1, 1]} : vector<8x64xf32> to vector<8x16xf32>
    %59 = arith.truncf %58 : vector<8x16xf32> to vector<8x16xbf16>
    %60 = vector.extract_strided_slice %18 {offsets = [0, 32], sizes = [8, 16], strides = [1, 1]} : vector<8x64xf32> to vector<8x16xf32>
    %61 = arith.truncf %60 : vector<8x16xf32> to vector<8x16xbf16>
    %62 = vector.extract_strided_slice %19 {offsets = [0, 32], sizes = [8, 16], strides = [1, 1]} : vector<8x64xf32> to vector<8x16xf32>
    %63 = arith.truncf %62 : vector<8x16xf32> to vector<8x16xbf16>
    %cst_18 = arith.constant dense<0.000000e+00> : vector<8x8xf32>
    %64 = tpu.matmul %59, %61, %cst_18 {dimension_numbers = #tpu.dot_dimension_numbers<[1], [1], [0], [0], [0, 0, 1, 0], [], []>} : vector<8x16xbf16>, vector<8x16xbf16>, vector<8x8xf32> -> vector<8x8xf32>
    %cst_19 = arith.constant dense<0xFF800000> : vector<8xf32>
    %65 = vector.multi_reduction <maximumf>, %64, %cst_19 [1] : vector<8x8xf32> to vector<8xf32>
    %66 = vector.shape_cast %65 : vector<8xf32> to vector<8x1xf32>
    %67 = vector.broadcast %66 : vector<8x1xf32> to vector<8x8xf32>
    %68 = arith.subf %64, %67 : vector<8x8xf32>
    %69 = math.exp %68 : vector<8x8xf32>
    %cst_20 = arith.constant dense<0.000000e+00> : vector<8xf32>
    %70 = vector.multi_reduction <add>, %69, %cst_20 [1] : vector<8x8xf32> to vector<8xf32>
    %71 = vector.shape_cast %70 : vector<8xf32> to vector<8x1xf32>
    %72 = tpu.reciprocal %71 {approx = true} : vector<8x1xf32> -> vector<8x1xf32>
    %73 = vector.broadcast %72 : vector<8x1xf32> to vector<8x8xf32>
    %74 = arith.mulf %69, %73 : vector<8x8xf32>
    %75 = arith.truncf %74 : vector<8x8xf32> to vector<8x8xbf16>
    %cst_21 = arith.constant dense<0.000000e+00> : vector<8x16xf32>
    %76 = tpu.matmul %75, %63, %cst_21 {dimension_numbers = #tpu.dot_dimension_numbers<[1], [0], [0], [1], [0, 0, 1, 1], [], []>} : vector<8x8xbf16>, vector<8x16xbf16>, vector<8x16xf32> -> vector<8x16xf32>
    %77 = vector.extract_strided_slice %12 {offsets = [0, 48], sizes = [8, 16], strides = [1, 1]} : vector<8x64xf32> to vector<8x16xf32>
    %78 = arith.truncf %77 : vector<8x16xf32> to vector<8x16xbf16>
    %79 = vector.extract_strided_slice %18 {offsets = [0, 48], sizes = [8, 16], strides = [1, 1]} : vector<8x64xf32> to vector<8x16xf32>
    %80 = arith.truncf %79 : vector<8x16xf32> to vector<8x16xbf16>
    %81 = vector.extract_strided_slice %19 {offsets = [0, 48], sizes = [8, 16], strides = [1, 1]} : vector<8x64xf32> to vector<8x16xf32>
    %82 = arith.truncf %81 : vector<8x16xf32> to vector<8x16xbf16>
    %cst_22 = arith.constant dense<0.000000e+00> : vector<8x8xf32>
    %83 = tpu.matmul %78, %80, %cst_22 {dimension_numbers = #tpu.dot_dimension_numbers<[1], [1], [0], [0], [0, 0, 1, 0], [], []>} : vector<8x16xbf16>, vector<8x16xbf16>, vector<8x8xf32> -> vector<8x8xf32>
    %cst_23 = arith.constant dense<0xFF800000> : vector<8xf32>
    %84 = vector.multi_reduction <maximumf>, %83, %cst_23 [1] : vector<8x8xf32> to vector<8xf32>
    %85 = vector.shape_cast %84 : vector<8xf32> to vector<8x1xf32>
    %86 = vector.broadcast %85 : vector<8x1xf32> to vector<8x8xf32>
    %87 = arith.subf %83, %86 : vector<8x8xf32>
    %88 = math.exp %87 : vector<8x8xf32>
    %cst_24 = arith.constant dense<0.000000e+00> : vector<8xf32>
    %89 = vector.multi_reduction <add>, %88, %cst_24 [1] : vector<8x8xf32> to vector<8xf32>
    %90 = vector.shape_cast %89 : vector<8xf32> to vector<8x1xf32>
    %91 = tpu.reciprocal %90 {approx = true} : vector<8x1xf32> -> vector<8x1xf32>
    %92 = vector.broadcast %91 : vector<8x1xf32> to vector<8x8xf32>
    %93 = arith.mulf %88, %92 : vector<8x8xf32>
    %94 = arith.truncf %93 : vector<8x8xf32> to vector<8x8xbf16>
    %cst_25 = arith.constant dense<0.000000e+00> : vector<8x16xf32>
    %95 = tpu.matmul %94, %82, %cst_25 {dimension_numbers = #tpu.dot_dimension_numbers<[1], [0], [0], [1], [0, 0, 1, 1], [], []>} : vector<8x8xbf16>, vector<8x16xbf16>, vector<8x16xf32> -> vector<8x16xf32>
    %96 = tpu.concatenate %38, %57, %76, %95 in 1 : vector<8x16xf32>, vector<8x16xf32>, vector<8x16xf32>, vector<8x16xf32> -> vector<8x64xf32>
    %97 = arith.truncf %96 : vector<8x64xf32> to vector<8x64xbf16>
    %c0_26 = arith.constant 0 : index
    %c0_27 = arith.constant 0 : index
    %98 = vector.load %arg5[%c0_26, %c0_27] : memref<64x64xbf16, #tpu.memory_space<vmem>>, vector<64x64xbf16>
    %cst_28 = arith.constant dense<0.000000e+00> : vector<8x64xf32>
    %99 = tpu.matmul %97, %98, %cst_28 {dimension_numbers = #tpu.dot_dimension_numbers<[1], [0], [0], [1], [0, 0, 1, 1], [], []>} : vector<8x64xbf16>, vector<64x64xbf16>, vector<8x64xf32> -> vector<8x64xf32>
    %c0_29 = arith.constant 0 : index
    %c0_30 = arith.constant 0 : index
    %100 = vector.load %arg6[%c0_29, %c0_30] : memref<1x64xf32, #tpu.memory_space<vmem>>, vector<1x64xf32>
    %101 = vector.broadcast %100 : vector<1x64xf32> to vector<8x64xf32>
    %102 = arith.addf %99, %101 : vector<8x64xf32>
    %c0_31 = arith.constant 0 : index
    %c0_32 = arith.constant 0 : index
    %c0_33 = arith.constant 0 : index
    %103 = vector.load %arg9[%c0_31, %c0_32, %c0_33] : memref<1x8x64xf32, #tpu.memory_space<vmem>>, vector<1x8x64xf32>
    %104 = vector.shape_cast %103 : vector<1x8x64xf32> to vector<8x64xf32>
    %105 = vector.shape_cast %102 : vector<8x64xf32> to vector<1x8x64xf32>
    tpu.vector_store %arg9[%c0_31, %c0_32, %c0_33], %105 {strides = array<i32>} : memref<1x8x64xf32, #tpu.memory_space<vmem>>, vector<1x8x64xf32>,
    %106 = arith.addf %102, %1 : vector<8x64xf32>
    %cst_34 = arith.constant dense<0.000000e+00> : vector<8xf32>
    %107 = vector.multi_reduction <add>, %106, %cst_34 [1] : vector<8x64xf32> to vector<8xf32>
    %108 = vector.shape_cast %107 : vector<8xf32> to vector<8x1xf32>
    %cst_35 = arith.constant 6.400000e+01 : f32
    %109 = vector.broadcast %cst_35 : f32 to vector<8x1xf32>
    %110 = arith.divf %108, %109 : vector<8x1xf32>
    %111 = vector.broadcast %110 : vector<8x1xf32> to vector<8x64xf32>
    %112 = arith.subf %106, %111 : vector<8x64xf32>
    %113 = arith.mulf %112, %112 : vector<8x64xf32>
    %cst_36 = arith.constant dense<0.000000e+00> : vector<8xf32>
    %114 = vector.multi_reduction <add>, %113, %cst_36 [1] : vector<8x64xf32> to vector<8xf32>
    %115 = vector.shape_cast %114 : vector<8xf32> to vector<8x1xf32>
    %cst_37 = arith.constant 6.400000e+01 : f32
    %116 = vector.broadcast %cst_37 : f32 to vector<8x1xf32>
    %117 = arith.divf %115, %116 : vector<8x1xf32>
    %118 = vector.broadcast %110 : vector<8x1xf32> to vector<8x64xf32>
    %119 = arith.subf %106, %118 : vector<8x64xf32>
    %cst_38 = arith.constant 9.99999974E-6 : f32
    %120 = vector.broadcast %cst_38 : f32 to vector<8x1xf32>
    %121 = arith.addf %117, %120 : vector<8x1xf32>
    %122 = math.rsqrt %121 : vector<8x1xf32>
    %123 = vector.broadcast %122 : vector<8x1xf32> to vector<8x64xf32>
    %124 = arith.mulf %119, %123 : vector<8x64xf32>
    %c0_39 = arith.constant 0 : index
    %c0_40 = arith.constant 0 : index
    %125 = vector.load %arg7[%c0_39, %c0_40] : memref<1x64xf32, #tpu.memory_space<vmem>>, vector<1x64xf32>
    %126 = vector.broadcast %125 : vector<1x64xf32> to vector<8x64xf32>
    %127 = arith.mulf %124, %126 : vector<8x64xf32>
    %c0_41 = arith.constant 0 : index
    %c0_42 = arith.constant 0 : index
    %128 = vector.load %arg8[%c0_41, %c0_42] : memref<1x64xf32, #tpu.memory_space<vmem>>, vector<1x64xf32>
    %129 = vector.broadcast %128 : vector<1x64xf32> to vector<8x64xf32>
    %130 = arith.addf %127, %129 : vector<8x64xf32>
    %c0_43 = arith.constant 0 : index
    %c0_44 = arith.constant 0 : index
    %c0_45 = arith.constant 0 : index
    %131 = vector.load %arg10[%c0_43, %c0_44, %c0_45] : memref<1x8x64xf32, #tpu.memory_space<vmem>>, vector<1x8x64xf32>
    %132 = vector.shape_cast %131 : vector<1x8x64xf32> to vector<8x64xf32>
    %133 = vector.shape_cast %130 : vector<8x64xf32> to vector<1x8x64xf32>
    tpu.vector_store %arg10[%c0_43, %c0_44, %c0_45], %133 {strides = array<i32>} : memref<1x8x64xf32, #tpu.memory_space<vmem>>, vector<1x8x64xf32>,
    return
  }
  func.func @transform_0(%arg0: i32) -> (i32, i32, i32) {
    %c0_i32 = arith.constant 0 : i32
    %c0_i32_0 = arith.constant 0 : i32
    %c0_i32_1 = arith.constant 0 : i32
    return %arg0, %c0_i32, %c0_i32_0 : i32, i32, i32
  }
  func.func @transform_1(%arg0: i32) -> (i32, i32, i32) {
    %c0_i32 = arith.constant 0 : i32
    %c0_i32_0 = arith.constant 0 : i32
    %c0_i32_1 = arith.constant 0 : i32
    return %arg0, %c0_i32, %c0_i32_0 : i32, i32, i32
  }
  func.func @transform_2(%arg0: i32) -> (i32, i32) {
    %c0_i32 = arith.constant 0 : i32
    %c0_i32_0 = arith.constant 0 : i32
    %c0_i32_1 = arith.constant 0 : i32
    return %c0_i32, %c0_i32_0 : i32, i32
  }
  func.func @transform_3(%arg0: i32) -> (i32, i32) {
    %c0_i32 = arith.constant 0 : i32
    %c0_i32_0 = arith.constant 0 : i32
    %c0_i32_1 = arith.constant 0 : i32
    return %c0_i32, %c0_i32_0 : i32, i32
  }
  func.func @transform_4(%arg0: i32) -> (i32, i32) {
    %c0_i32 = arith.constant 0 : i32
    %c0_i32_0 = arith.constant 0 : i32
    %c0_i32_1 = arith.constant 0 : i32
    return %c0_i32, %c0_i32_0 : i32, i32
  }
  func.func @transform_5(%arg0: i32) -> (i32, i32) {
    %c0_i32 = arith.constant 0 : i32
    %c0_i32_0 = arith.constant 0 : i32
    %c0_i32_1 = arith.constant 0 : i32
    return %c0_i32, %c0_i32_0 : i32, i32
  }
  func.func @transform_6(%arg0: i32) -> (i32, i32) {
    %c0_i32 = arith.constant 0 : i32
    %c0_i32_0 = arith.constant 0 : i32
    %c0_i32_1 = arith.constant 0 : i32
    return %c0_i32, %c0_i32_0 : i32, i32
  }
  func.func @transform_7(%arg0: i32) -> (i32, i32) {
    %c0_i32 = arith.constant 0 : i32
    %c0_i32_0 = arith.constant 0 : i32
    %c0_i32_1 = arith.constant 0 : i32
    return %c0_i32, %c0_i32_0 : i32, i32
  }
  func.func @transform_8(%arg0: i32) -> (i32, i32, i32) {
    %c0_i32 = arith.constant 0 : i32
    %c0_i32_0 = arith.constant 0 : i32
    %c0_i32_1 = arith.constant 0 : i32
    return %arg0, %c0_i32, %c0_i32_0 : i32, i32, i32
  }
  func.func @transform_9(%arg0: i32) -> (i32, i32, i32) {
    %c0_i32 = arith.constant 0 : i32
    %c0_i32_0 = arith.constant 0 : i32
    %c0_i32_1 = arith.constant 0 : i32
    return %arg0, %c0_i32, %c0_i32_0 : i32, i32, i32
  }
}

</mosaic_0001>

<llo_original>
// kernel: decoder_forward.5
$region0: #{decoder_forward.5}
  #allocation0 [shape = 'u32[]', space=smem, size = 0x4, offset = 0x4, fixed_abs, tag = 'smem constant byte address 0x4 - core index']
  #allocation1 [shape = 'u32[72,128]{1,0:T(1,128)}', space=vmem, size = 0x9000, scoped, tag = 'internal scratch']
  %s0 = inlined_call_operand.vmem [shape: f32[2,8,64], index: 0, kind: input, shape index: {}]
  %s1 = inlined_call_operand.vmem [shape: f32[2,8,64], index: 1, kind: input, shape index: {}]
  %s2 = inlined_call_operand.vmem [shape: bf16[64,32], index: 2, kind: input, shape index: {}]
  %s3 = inlined_call_operand.vmem [shape: f32[1,32], index: 3, kind: input, shape index: {}]
  %s4 = inlined_call_operand.vmem [shape: bf16[32,64], index: 4, kind: input, shape index: {}]
  %s5 = inlined_call_operand.vmem [shape: f32[1,64], index: 5, kind: input, shape index: {}]
  %s6 = inlined_call_operand.vmem [shape: f32[1,64], index: 6, kind: input, shape index: {}]
  %s7 = inlined_call_operand.vmem [shape: f32[1,64], index: 7, kind: input, shape index: {}]
  %s8 = inlined_call_operand.hbm [shape: f32[2,8,64], index: 8, kind: output, shape index: {}]
  %s9 = sld [smem:[#allocation0]]
  $region65: #{decoder_forward.5} parent=0
    _
  %s11 = ssub.s32 1, %s9
  %s12 = scalar_select 0, %s11, %s9
  $region1: #{decoder_forward.5} parent=0
    #allocation2 [shape = 'u8[8192]{0}', space=vmem, size = 0x2000, scoped, tag = 'output window, operand 0']
    #allocation3 [shape = 's32[2]{0}', space=sflag, size = 0x8, scoped, tag = 'scoped memory for decoder_forward.5']
    %13 = vsyncpa [#allocation3], 0
    %s14 = scalar_lea.sflag [#allocation3], 1
    %15 = vsyncpa %s14, 0
    loop: start=0, step=1, limit=4
    $region2: #{decoder_forward.5} parent=1 // loop_pre_header
      _
    $region3: #{decoder_forward.5} parent=1 // loop_header
      %s17 = sphi 0, %s21
      %p18 = scmp.ge.s32.totalorder %s17, 4
      %s27 = sphi 0, %s29
      %s30 = sphi 0, %s27
      %s31 = sphi 0, %s30
      %s47 = sphi 0, %s31
      %s53 = sphi 0, %s55
      %s56 = sphi 0, %s53
      %s57 = sphi 0, %s56
      %s73 = sphi 0, %s57
      %s77 = sphi 0, %s77
      %s79 = sphi 0, %s77
      %s80 = sphi 0, %s79
      %s94 = sphi 0, %s80
      %s98 = sphi 0, %s98
      %s100 = sphi 0, %s98
      %s101 = sphi 0, %s100
      %s115 = sphi 0, %s101
      %s119 = sphi 0, %s119
      %s121 = sphi 0, %s119
      %s122 = sphi 0, %s121
      %s136 = sphi 0, %s122
      %s140 = sphi 0, %s140
      %s142 = sphi 0, %s140
      %s143 = sphi 0, %s142
      %s157 = sphi 0, %s143
      %s161 = sphi 0, %s161
      %s163 = sphi 0, %s161
      %s164 = sphi 0, %s163
      %s178 = sphi 0, %s164
      %s182 = sphi 0, %s182
      %s184 = sphi 0, %s182
      %s185 = sphi 0, %s184
      %s199 = sphi 0, %s185
      %s205 = sphi 0, %s207
      %s208 = sphi 0, %s205
      %s209 = sphi 0, %s208
      %s225 = sphi 0, %s209
    $region4: #{decoder_forward.5} parent=1 // loop_header_branch
      %20 = sbr.rel (%p18) target = $region8
    $region5: #{decoder_forward.5} parent=1 // loop_body
      %s22 = ssub.s32 %s17, 1
      %s23 = ssub.s32 %s17, 2
      %s24 = sadd.s32 %s17, 1
      %s25 = ssub.s32 %s17, %s24
      %p26 = scmp.eq.s32.totalorder %s25, 0
      %s28 = sadd.s32 %s27, 1
      %s29 = scalar_select %p26, %s27, %s28
      %p32 = pneg %p26
      %p33 = scmp.eq.s32.totalorder %s17, 1
      %p34 = por %p32, %p33
      %p35 = scmp.ne.s32.totalorder %s27, %s30
      %p36 = scmp.eq.s32.totalorder %s17, 0
      %p37 = por %p35, %p36
      %p38 = scmp.ne.s32.totalorder %s27, %s30
      %p39 = scmp.eq.s32.totalorder %s22, 1
      %p40 = por %p38, %p39
      %p41 = scmp.ne.s32.totalorder %s30, %s31
      %p42 = scmp.eq.s32.totalorder %s22, 0
      %p43 = por %p41, %p42
      %p44 = scmp.ne.s32.totalorder %s30, %s31
      %p45 = scmp.eq.s32.totalorder %s23, 1
      %p46 = por %p44, %p45
      %p48 = scmp.ne.s32.totalorder %s31, %s47
      %p49 = scmp.eq.s32.totalorder %s23, 0
      %p50 = por %p48, %p49
      %s51 = ssub.s32 %s17, %s24
      %p52 = scmp.eq.s32.totalorder %s51, 0
      %s54 = sadd.s32 %s53, 1
      %s55 = scalar_select %p52, %s53, %s54
      %p58 = pneg %p52
      %p59 = scmp.eq.s32.totalorder %s17, 1
      %p60 = por %p58, %p59
      %p61 = scmp.ne.s32.totalorder %s53, %s56
      %p62 = scmp.eq.s32.totalorder %s17, 0
      %p63 = por %p61, %p62
      %p64 = scmp.ne.s32.totalorder %s53, %s56
      %p65 = scmp.eq.s32.totalorder %s22, 1
      %p66 = por %p64, %p65
      %p67 = scmp.ne.s32.totalorder %s56, %s57
      %p68 = scmp.eq.s32.totalorder %s22, 0
      %p69 = por %p67, %p68
      %p70 = scmp.ne.s32.totalorder %s56, %s57
      %p71 = scmp.eq.s32.totalorder %s23, 1
      %p72 = por %p70, %p71
      %p74 = scmp.ne.s32.totalorder %s57, %s73
      %p75 = scmp.eq.s32.totalorder %s23, 0
      %p76 = por %p74, %p75
      %s78 = sadd.s32 %s77, 1
      %p81 = scmp.eq.s32.totalorder %s17, 1
      %p82 = scmp.ne.s32.totalorder %s77, %s79
      %p83 = scmp.eq.s32.totalorder %s17, 0
      %p84 = por %p82, %p83
      %p85 = scmp.ne.s32.totalorder %s77, %s79
      %p86 = scmp.eq.s32.totalorder %s22, 1
      %p87 = por %p85, %p86
      %p88 = scmp.ne.s32.totalorder %s79, %s80
      %p89 = scmp.eq.s32.totalorder %s22, 0
      %p90 = por %p88, %p89
      %p91 = scmp.ne.s32.totalorder %s79, %s80
      %p92 = scmp.eq.s32.totalorder %s23, 1
      %p93 = por %p91, %p92
      %p95 = scmp.ne.s32.totalorder %s80, %s94
      %p96 = scmp.eq.s32.totalorder %s23, 0
      %p97 = por %p95, %p96
      %s99 = sadd.s32 %s98, 1
      %p102 = scmp.eq.s32.totalorder %s17, 1
      %p103 = scmp.ne.s32.totalorder %s98, %s100
      %p104 = scmp.eq.s32.totalorder %s17, 0
      %p105 = por %p103, %p104
      %p106 = scmp.ne.s32.totalorder %s98, %s100
      %p107 = scmp.eq.s32.totalorder %s22, 1
      %p108 = por %p106, %p107
      %p109 = scmp.ne.s32.totalorder %s100, %s101
      %p110 = scmp.eq.s32.totalorder %s22, 0
      %p111 = por %p109, %p110
      %p112 = scmp.ne.s32.totalorder %s100, %s101
      %p113 = scmp.eq.s32.totalorder %s23, 1
      %p114 = por %p112, %p113
      %p116 = scmp.ne.s32.totalorder %s101, %s115
      %p117 = scmp.eq.s32.totalorder %s23, 0
      %p118 = por %p116, %p117
      %s120 = sadd.s32 %s119, 1
      %p123 = scmp.eq.s32.totalorder %s17, 1
      %p124 = scmp.ne.s32.totalorder %s119, %s121
      %p125 = scmp.eq.s32.totalorder %s17, 0
      %p126 = por %p124, %p125
      %p127 = scmp.ne.s32.totalorder %s119, %s121
      %p128 = scmp.eq.s32.totalorder %s22, 1
      %p129 = por %p127, %p128
      %p130 = scmp.ne.s32.totalorder %s121, %s122
      %p131 = scmp.eq.s32.totalorder %s22, 0
      %p132 = por %p130, %p131
      %p133 = scmp.ne.s32.totalorder %s121, %s122
      %p134 = scmp.eq.s32.totalorder %s23, 1
      %p135 = por %p133, %p134
      %p137 = scmp.ne.s32.totalorder %s122, %s136
      %p138 = scmp.eq.s32.totalorder %s23, 0
      %p139 = por %p137, %p138
      %s141 = sadd.s32 %s140, 1
      %p144 = scmp.eq.s32.totalorder %s17, 1
      %p145 = scmp.ne.s32.totalorder %s140, %s142
      %p146 = scmp.eq.s32.totalorder %s17, 0
      %p147 = por %p145, %p146
      %p148 = scmp.ne.s32.totalorder %s140, %s142
      %p149 = scmp.eq.s32.totalorder %s22, 1
      %p150 = por %p148, %p149
      %p151 = scmp.ne.s32.totalorder %s142, %s143
      %p152 = scmp.eq.s32.totalorder %s22, 0
      %p153 = por %p151, %p152
      %p154 = scmp.ne.s32.totalorder %s142, %s143
      %p155 = scmp.eq.s32.totalorder %s23, 1
      %p156 = por %p154, %p155
      %p158 = scmp.ne.s32.totalorder %s143, %s157
      %p159 = scmp.eq.s32.totalorder %s23, 0
      %p160 = por %p158, %p159
      %s162 = sadd.s32 %s161, 1
      %p165 = scmp.eq.s32.totalorder %s17, 1
      %p166 = scmp.ne.s32.totalorder %s161, %s163
      %p167 = scmp.eq.s32.totalorder %s17, 0
      %p168 = por %p166, %p167
      %p169 = scmp.ne.s32.totalorder %s161, %s163
      %p170 = scmp.eq.s32.totalorder %s22, 1
      %p171 = por %p169, %p170
      %p172 = scmp.ne.s32.totalorder %s163, %s164
      %p173 = scmp.eq.s32.totalorder %s22, 0
      %p174 = por %p172, %p173
      %p175 = scmp.ne.s32.totalorder %s163, %s164
      %p176 = scmp.eq.s32.totalorder %s23, 1
      %p177 = por %p175, %p176
      %p179 = scmp.ne.s32.totalorder %s164, %s178
      %p180 = scmp.eq.s32.totalorder %s23, 0
      %p181 = por %p179, %p180
      %s183 = sadd.s32 %s182, 1
      %p186 = scmp.eq.s32.totalorder %s17, 1
      %p187 = scmp.ne.s32.totalorder %s182, %s184
      %p188 = scmp.eq.s32.totalorder %s17, 0
      %p189 = por %p187, %p188
      %p190 = scmp.ne.s32.totalorder %s182, %s184
      %p191 = scmp.eq.s32.totalorder %s22, 1
      %p192 = por %p190, %p191
      %p193 = scmp.ne.s32.totalorder %s184, %s185
      %p194 = scmp.eq.s32.totalorder %s22, 0
      %p195 = por %p193, %p194
      %p196 = scmp.ne.s32.totalorder %s184, %s185
      %p197 = scmp.eq.s32.totalorder %s23, 1
      %p198 = por %p196, %p197
      %p200 = scmp.ne.s32.totalorder %s185, %s199
      %p201 = scmp.eq.s32.totalorder %s23, 0
      %p202 = por %p200, %p201
      %s203 = ssub.s32 %s17, %s24
      %p204 = scmp.eq.s32.totalorder %s203, 0
      %s206 = sadd.s32 %s205, 1
      %s207 = scalar_select %p204, %s205, %s206
      %p210 = pneg %p204
      %p211 = scmp.eq.s32.totalorder %s17, 1
      %p212 = por %p210, %p211
      %p213 = scmp.ne.s32.totalorder %s205, %s208
      %p214 = scmp.eq.s32.totalorder %s17, 0
      %p215 = por %p213, %p214
      %p216 = scmp.ne.s32.totalorder %s205, %s208
      %p217 = scmp.eq.s32.totalorder %s22, 1
      %p218 = por %p216, %p217
      %p219 = scmp.ne.s32.totalorder %s208, %s209
      %p220 = scmp.eq.s32.totalorder %s22, 0
      %p221 = por %p219, %p220
      %p222 = scmp.ne.s32.totalorder %s208, %s209
      %p223 = scmp.eq.s32.totalorder %s23, 1
      %p224 = por %p222, %p223
      %p226 = scmp.ne.s32.totalorder %s209, %s225
      %p227 = scmp.eq.s32.totalorder %s23, 0
      %p228 = por %p226, %p227
      %p229 = scmp.le.s32.totalorder 1, %s17
      %p230 = scmp.lt.s32.totalorder %s17, 3
      %p231 = pnand %p229, %p230
      %p232 = pneg %p231
      // Predicated region
      $region9: #{decoder_forward.5} parent=5 // pred_check
        _
      $region10: #{decoder_forward.5} parent=5 // pred_check_branch
        %234 = sbr.rel (%p231) target = $region12
      $region11: #{decoder_forward.5} parent=5 // pred_region
        %s235 = ssub.s32 %s17, 1
        // Predicated region
        $region13: #{decoder_forward.5} parent=11 // pred_check
          %p236 = pneg %p90
        $region14: #{decoder_forward.5} parent=11 // pred_check_branch
          %238 = sbr.rel (%p236) target = $region16
        $region15: #{decoder_forward.5} parent=11 // pred_region
          _
        $region16: #{decoder_forward.5} parent=11 // pred_fallthru
          _
        // Predicated region
        $region17: #{decoder_forward.5} parent=11 // pred_check
          %p239 = pneg %p111
        $region18: #{decoder_forward.5} parent=11 // pred_check_branch
          %241 = sbr.rel (%p239) target = $region20
        $region19: #{decoder_forward.5} parent=11 // pred_region
          _
        $region20: #{decoder_forward.5} parent=11 // pred_fallthru
          _
        // Predicated region
        $region21: #{decoder_forward.5} parent=11 // pred_check
          %p242 = pneg %p132
        $region22: #{decoder_forward.5} parent=11 // pred_check_branch
          %244 = sbr.rel (%p242) target = $region24
        $region23: #{decoder_forward.5} parent=11 // pred_region
          _
        $region24: #{decoder_forward.5} parent=11 // pred_fallthru
          _
        // Predicated region
        $region25: #{decoder_forward.5} parent=11 // pred_check
          %p245 = pneg %p153
        $region26: #{decoder_forward.5} parent=11 // pred_check_branch
          %247 = sbr.rel (%p245) target = $region28
        $region27: #{decoder_forward.5} parent=11 // pred_region
          _
        $region28: #{decoder_forward.5} parent=11 // pred_fallthru
          _
        // Predicated region
        $region29: #{decoder_forward.5} parent=11 // pred_check
          %p248 = pneg %p174
        $region30: #{decoder_forward.5} parent=11 // pred_check_branch
          %250 = sbr.rel (%p248) target = $region32
        $region31: #{decoder_forward.5} parent=11 // pred_region
          _
        $region32: #{decoder_forward.5} parent=11 // pred_fallthru
          _
        // Predicated region
        $region33: #{decoder_forward.5} parent=11 // pred_check
          %p251 = pneg %p195
        $region34: #{decoder_forward.5} parent=11 // pred_check_branch
          %253 = sbr.rel (%p251) target = $region36
        $region35: #{decoder_forward.5} parent=11 // pred_region
          _
        $region36: #{decoder_forward.5} parent=11 // pred_fallthru
          _
      $region12: #{decoder_forward.5} parent=5 // pred_fallthru
        _
      %p254 = scmp.lt.s32.totalorder %s17, 2
      // Predicated region
      $region37: #{decoder_forward.5} parent=5 // pred_check
        %p255 = pneg %p254
      $region38: #{decoder_forward.5} parent=5 // pred_check_branch
        %257 = sbr.rel (%p255) target = $region40
      $region39: #{decoder_forward.5} parent=5 // pred_region
        // Predicated region
        $region41: #{decoder_forward.5} parent=39 // pred_check
          %p258 = pneg %p37
        $region42: #{decoder_forward.5} parent=39 // pred_check_branch
          %260 = sbr.rel (%p258) target = $region44
        $region43: #{decoder_forward.5} parent=39 // pred_region
          %p261 = scmp.lt.s32.totalorder %s17, 1
          %s262 = scalar_select %p261, %s17, 1
          %s263 = smul.addr %s262, 8
          %s264 = scalar_lea.vmem %s0, %s263
        $region44: #{decoder_forward.5} parent=39 // pred_fallthru
          _
        // Predicated region
        $region45: #{decoder_forward.5} parent=39 // pred_check
          %p265 = pneg %p63
        $region46: #{decoder_forward.5} parent=39 // pred_check_branch
          %267 = sbr.rel (%p265) target = $region48
        $region47: #{decoder_forward.5} parent=39 // pred_region
          %p268 = scmp.lt.s32.totalorder %s17, 1
          %s269 = scalar_select %p268, %s17, 1
          %s270 = smul.addr %s269, 8
          %s271 = scalar_lea.vmem %s1, %s270
        $region48: #{decoder_forward.5} parent=39 // pred_fallthru
          _
      $region40: #{decoder_forward.5} parent=5 // pred_fallthru
        _
      %p272 = scmp.le.s32.totalorder 1, %s17
      %p273 = scmp.lt.s32.totalorder %s17, 3
      %p274 = pnand %p272, %p273
      %p275 = pneg %p274
      // Predicated region
      $region49: #{decoder_forward.5} parent=5 // pred_check
        _
      $region50: #{decoder_forward.5} parent=5 // pred_check_branch
        %277 = sbr.rel (%p274) target = $region52
      $region51: #{decoder_forward.5} parent=5 // pred_region
        %s278 = ssub.s32 %s17, 1
        %p279 = scmp.lt.s32.totalorder %s22, 1
        %s280 = scalar_select %p279, %s22, 1
        %s281 = smul.addr %s280, 8
        %s282 = scalar_lea.vmem %s0, %s281
        %p283 = pneg %p43
        %p284 = pneg %p40
        %p285 = scmp.lt.s32.totalorder %s22, 1
        %s286 = scalar_select %p285, %s22, 1
        %s287 = smul.addr %s286, 8
        %s288 = scalar_lea.vmem %s1, %s287
        %p289 = pneg %p69
        %p290 = pneg %p66
        %p291 = pneg %p90
        %p292 = pneg %p87
        %p293 = pneg %p111
        %p294 = pneg %p108
        %p295 = pneg %p132
        %p296 = pneg %p129
        %p297 = pneg %p153
        %p298 = pneg %p150
        %p299 = pneg %p174
        %p300 = pneg %p171
        %p301 = pneg %p195
        %p302 = pneg %p192
        %p303 = pneg %p221
        %p304 = pneg %p218
        %s305 = sand.u32 %s208, 1
        %s306 = scalar_lea.sflag [#allocation3], %s305
        %s307 = sand.u32 %s208, 1
        %s308 = smul.addr %s307, 8
        %s309 = scalar_lea.vmem [#allocation2], %s308
        %p310 = scmp.lt.s32.totalorder %s22, 1
        %s311 = scalar_select %p310, %s22, 1
        %s312 = smul.addr %s311, 8
        %s313 = scalar_lea.vmem %s0, %s312
        %p314 = scmp.lt.s32.totalorder %s22, 1
        %s315 = scalar_select %p314, %s22, 1
        %s316 = smul.addr %s315, 8
        %s317 = scalar_lea.vmem %s1, %s316
        %v319 = vld [vmem:[%s313] sm:$0xff]
        %v320 = vpack.c.bf16 %v319, %v319
        %v321 = vld [vmem:[%s2] sm:$0xf]
        %v322 = vld [vmem:[%s2 + $0x4] sm:$0xf]
        %v323 = vld [vmem:[%s2 + $0x8] sm:$0xf]
        %v324 = vld [vmem:[%s2 + $0xc] sm:$0xf]
        %v325 = vld [vmem:[%s2 + $0x10] sm:$0xf]
        %v326 = vld [vmem:[%s2 + $0x14] sm:$0xf]
        %v327 = vld [vmem:[%s2 + $0x18] sm:$0xf]
        %v328 = vld [vmem:[%s2 + $0x1c] sm:$0xf]
        %v329 = vld [vmem:[%s3] sm:$0x1]
        %v331 = vperm.slane %v329, 0
        %v341 = vunpack.c.l.b16 %v321
        %v342 = vunpack.c.l.b16 %v322
        %v343 = vunpack.c.l.b16 %v323
        %v344 = vunpack.c.l.b16 %v324
        %v345 = vunpack.c.l.b16 %v325
        %v346 = vunpack.c.l.b16 %v326
        %v347 = vunpack.c.l.b16 %v327
        %v348 = vunpack.c.l.b16 %v328
        %v349 = vpack.c.b16 %v342, %v341
        %v350 = vpack.c.b16 %v344, %v343
        %v351 = vpack.c.b16 %v346, %v345
        %v352 = vpack.c.b16 %v348, %v347
        %vm357 = vcmask 523264
        %v359 = vsel %vm357, %v320, 0
        %361 = vmatpush.bf16.msra.mxu0 0
        %362 = vmatpush.bf16.msra.mxu0 0
        %363 = vmatpush.bf16.msra.mxu0 0
        %364 = vmatpush.bf16.msra.mxu0 0
        %365 = vmatpush.bf16.msra.mxu0 %v352
        %366 = vmatpush.bf16.msra.mxu0 %v351
        %367 = vmatpush.bf16.msra.mxu0 %v350
        %368 = vmatpush.bf16.msra.mxu0 %v349
        %369 = vmatmul.bf16.gmra.mxu0 %v359
        %v370 = vpop.f32.mrf.mxu0
        %v371 = vadd.f32 %v331, %v370
        %v372 = vpop.f32.mrf.mxu0
        %373 = vdwg.mxu0
        %v374 = vmax.f32 %v371, 0.0
        %v375 = vpack.c.bf16 %v374, %v374
        %v376 = vld [vmem:[%s4] sm:$0xf]
        %v377 = vld [vmem:[%s4 + $0x4] sm:$0xf]
        %v378 = vld [vmem:[%s4 + $0x8] sm:$0xf]
        %v379 = vld [vmem:[%s4 + $0xc] sm:$0xf]
        %v380 = vld [vmem:[%s5] sm:$0x1]
        %v382 = vperm.slane %v380, 0
        %v388 = vunpack.c.l.b16 %v376
        %v389 = vunpack.c.l.b16 %v377
        %v390 = vunpack.c.l.b16 %v378
        %v391 = vunpack.c.l.b16 %v379
        %v392 = vpack.c.b16 %v389, %v388
        %v393 = vpack.c.b16 %v391, %v390
        %vm396 = vcmask 261120
        %v398 = vsel %vm396, %v375, 0
        %400 = vmatpush.bf16.msra.mxu0 0
        %401 = vmatpush.bf16.msra.mxu0 0
        %402 = vmatpush.bf16.msra.mxu0 0
        %403 = vmatpush.bf16.msra.mxu0 0
        %404 = vmatpush.bf16.msra.mxu0 0
        %405 = vmatpush.bf16.msra.mxu0 0
        %406 = vmatpush.bf16.msra.mxu0 %v393
        %407 = vmatpush.bf16.msra.mxu0 %v392
        %408 = vmatmul.bf16.gmra.mxu0 %v398
        %v409 = vpop.f32.mrf.mxu0
        %v410 = vadd.f32 %v382, %v409
        %v411 = vpop.f32.mrf.mxu0
        %412 = vdwg.mxu0
        %v413 = vld [vmem:[%s317] sm:$0xff]
        %v414 = vadd.f32 %v410, %v413
        %v415 = vsel %vm357, %v414, 0.0
        %416 = vadd.xlane.f32.xlu0 %v415
        %v417 = vpop.xlane.xlu0 %416
        %v418 = vrcp.pop 64.0
        %v419 = vmul.f32 64.0, %v418
        %v420 = vsub.f32 1.0, %v419
        %v421 = vmul.f32 %v418, %v420
        %v422 = vadd.f32 %v418, %v421
        %vm423 = vweird.f32 %v418
        %v424 = vsel %vm423, %v418, %v422
        %v425 = vmul.f32 %v417, %v424
        %v426 = vsub.f32 %v414, %v425
        %v427 = vmul.f32 %v426, %v426
        %v428 = vsel %vm357, %v427, 0.0
        %429 = vadd.xlane.f32.xlu0 %v428
        %v430 = vpop.xlane.xlu0 %429
        %v431 = vmul.f32 %v430, %v424
        %v432 = vadd.f32 %v431, 1e-05
        %v433 = vrsqrt.pop %v432
        %v434 = vmul.f32 %v433, %v432
        %v435 = vmul.f32 %v434, %v433
        %v436 = vmul.f32 0.5, %v435
        %v437 = vsub.f32 1.5, %v436
        %v438 = vmul.f32 %v433, %v437
        %vm439 = vweird.f32 %v432
        %vm440 = vweird.f32 %v433
        %vm441 = vmor %vm439, %vm440
        %v442 = vsel %vm441, %v433, %v438
        %v443 = vmul.f32 %v426, %v442
        %v444 = vld [vmem:[%s6] sm:$0x1]
        %v446 = vperm.slane %v444, 0
        %v448 = vmul.f32 %v443, %v446
        %v449 = vld [vmem:[%s7] sm:$0x1]
        %v451 = vperm.slane %v449, 0
        %v453 = vadd.f32 %v448, %v451
        %454 = vst.msk [vmem:[%s309] sm:$0xff] %vm357, %v453
        %s455 = sand.u32 %s208, 1
        %s456 = scalar_lea.sflag [#allocation3], %s455
        %s457 = sand.u32 %s208, 1
        %s458 = smul.addr %s457, 8
        %s459 = scalar_lea.vmem [#allocation2], %s458
        // Predicated region
        $region53: #{decoder_forward.5} parent=51 // pred_check
          %p460 = pneg %p218
        $region54: #{decoder_forward.5} parent=51 // pred_check_branch
          %462 = sbr.rel (%p460) target = $region56
        $region55: #{decoder_forward.5} parent=51 // pred_region
          %464 = vsyncadd %s456, 0
          %s465 = smul.addr %s22, 8
          %s466 = scalar_lea.hbm %s8, %s465
          %s468 = sshll.u32 %s459, 4
          %s469 = int_to_ptr.vmem [resolvable:$true] %s468
          %s470 = sshll.u32 %s466, 4
          %s471 = int_to_ptr.hbm [resolvable:$true] %s470
          %473 = dma.vmem_to_hbm [thread:$0]  %s469, 128, %s471, %s456
        $region56: #{decoder_forward.5} parent=51 // pred_fallthru
          _
      $region52: #{decoder_forward.5} parent=5 // pred_fallthru
        _
      %p474 = scmp.le.s32.totalorder 2, %s17
      // Predicated region
      $region57: #{decoder_forward.5} parent=5 // pred_check
        %p475 = pneg %p474
      $region58: #{decoder_forward.5} parent=5 // pred_check_branch
        %477 = sbr.rel (%p475) target = $region60
      $region59: #{decoder_forward.5} parent=5 // pred_region
        %s478 = ssub.s32 %s17, 2
        // Predicated region
        $region61: #{decoder_forward.5} parent=59 // pred_check
          %p479 = pneg %p224
        $region62: #{decoder_forward.5} parent=59 // pred_check_branch
          %481 = sbr.rel (%p479) target = $region64
        $region63: #{decoder_forward.5} parent=59 // pred_region
          %s482 = sand.u32 %s209, 1
          %s483 = scalar_lea.sflag [#allocation3], %s482
          %s484 = sand.u32 %s209, 1
          %s485 = smul.addr %s484, 8
          %s486 = scalar_lea.vmem [#allocation2], %s485
          %488 = dma.done %s483, 128
        $region64: #{decoder_forward.5} parent=59 // pred_fallthru
          _
      $region60: #{decoder_forward.5} parent=5 // pred_fallthru
        _
    $region6: #{decoder_forward.5} parent=1 // loop_footer
      %s21 = sadd.s32 1, %s17
    $region7: #{decoder_forward.5} parent=1 // loop_footer_branch
      %16 = sbr.rel target = $region3
    $region8: #{decoder_forward.5} parent=1 // loop_exit
      _
    %489 = vsyncpa [#allocation3], 1
    %s490 = scalar_lea.sflag [#allocation3], 1
    %491 = vsyncpa %s490, 1

// kernel: decoder_forward.3
$region0: #{decoder_forward.3}
  #allocation0 [shape = 'u32[]', space=smem, size = 0x4, offset = 0x4, fixed_abs, tag = 'smem constant byte address 0x4 - core index']
  #allocation1 [shape = 'u32[72,128]{1,0:T(1,128)}', space=vmem, size = 0x9000, scoped, tag = 'internal scratch']
  %s0 = inlined_call_operand.vmem [shape: f32[2,8,64], index: 0, kind: input, shape index: {}, may-alias: {0,1}]
  %s1 = inlined_call_operand.vmem [shape: f32[2,8,64], index: 1, kind: input, shape index: {}, may-alias: {0,1}]
  %s2 = inlined_call_operand.vmem [shape: bf16[64,192], index: 2, kind: input, shape index: {}]
  %s3 = inlined_call_operand.vmem [shape: f32[1,192], index: 3, kind: input, shape index: {}]
  %s4 = inlined_call_operand.vmem [shape: bf16[64,64], index: 4, kind: input, shape index: {}]
  %s5 = inlined_call_operand.vmem [shape: f32[1,64], index: 5, kind: input, shape index: {}]
  %s6 = inlined_call_operand.vmem [shape: f32[1,64], index: 6, kind: input, shape index: {}]
  %s7 = inlined_call_operand.vmem [shape: f32[1,64], index: 7, kind: input, shape index: {}]
  %s8 = inlined_call_operand.hbm [shape: f32[2,8,64], index: 8, kind: output, shape index: {0}]
  %s9 = inlined_call_operand.vmem [shape: f32[2,8,64], index: 9, kind: output, shape index: {1}]
  %10 = xla_tuple %s8, %s9
  %s11 = sld [smem:[#allocation0]]
  $region73: #{decoder_forward.3} parent=0
    _
  %s13 = ssub.s32 1, %s11
  %s14 = scalar_select 0, %s13, %s11
  $region1: #{decoder_forward.3} parent=0
    #allocation2 [shape = 'u8[8192]{0}', space=vmem, size = 0x2000, scoped, tag = 'output window, operand 0']
    #allocation3 [shape = 's32[2]{0}', space=sflag, size = 0x8, scoped, tag = 'scoped memory for decoder_forward.3']
    %15 = vsyncpa [#allocation3], 0
    %s16 = scalar_lea.sflag [#allocation3], 1
    %17 = vsyncpa %s16, 0
    loop: start=0, step=1, limit=4
    $region2: #{decoder_forward.3} parent=1 // loop_pre_header
      _
    $region3: #{decoder_forward.3} parent=1 // loop_header
      %s19 = sphi 0, %s23
      %p20 = scmp.ge.s32.totalorder %s19, 4
      %s29 = sphi 0, %s31
      %s32 = sphi 0, %s29
      %s33 = sphi 0, %s32
      %s49 = sphi 0, %s33
      %s55 = sphi 0, %s57
      %s58 = sphi 0, %s55
      %s59 = sphi 0, %s58
      %s75 = sphi 0, %s59
      %s79 = sphi 0, %s79
      %s81 = sphi 0, %s79
      %s82 = sphi 0, %s81
      %s96 = sphi 0, %s82
      %s100 = sphi 0, %s100
      %s102 = sphi 0, %s100
      %s103 = sphi 0, %s102
      %s117 = sphi 0, %s103
      %s121 = sphi 0, %s121
      %s123 = sphi 0, %s121
      %s124 = sphi 0, %s123
      %s138 = sphi 0, %s124
      %s142 = sphi 0, %s142
      %s144 = sphi 0, %s142
      %s145 = sphi 0, %s144
      %s159 = sphi 0, %s145
      %s163 = sphi 0, %s163
      %s165 = sphi 0, %s163
      %s166 = sphi 0, %s165
      %s180 = sphi 0, %s166
      %s184 = sphi 0, %s184
      %s186 = sphi 0, %s184
      %s187 = sphi 0, %s186
      %s201 = sphi 0, %s187
      %s207 = sphi 0, %s209
      %s210 = sphi 0, %s207
      %s211 = sphi 0, %s210
      %s227 = sphi 0, %s211
      %s233 = sphi 0, %s235
      %s236 = sphi 0, %s233
      %s237 = sphi 0, %s236
      %s253 = sphi 0, %s237
    $region4: #{decoder_forward.3} parent=1 // loop_header_branch
      %22 = sbr.rel (%p20) target = $region8
    $region5: #{decoder_forward.3} parent=1 // loop_body
      %s24 = ssub.s32 %s19, 1
      %s25 = ssub.s32 %s19, 2
      %s26 = sadd.s32 %s19, 1
      %s27 = ssub.s32 %s19, %s26
      %p28 = scmp.eq.s32.totalorder %s27, 0
      %s30 = sadd.s32 %s29, 1
      %s31 = scalar_select %p28, %s29, %s30
      %p34 = pneg %p28
      %p35 = scmp.eq.s32.totalorder %s19, 1
      %p36 = por %p34, %p35
      %p37 = scmp.ne.s32.totalorder %s29, %s32
      %p38 = scmp.eq.s32.totalorder %s19, 0
      %p39 = por %p37, %p38
      %p40 = scmp.ne.s32.totalorder %s29, %s32
      %p41 = scmp.eq.s32.totalorder %s24, 1
      %p42 = por %p40, %p41
      %p43 = scmp.ne.s32.totalorder %s32, %s33
      %p44 = scmp.eq.s32.totalorder %s24, 0
      %p45 = por %p43, %p44
      %p46 = scmp.ne.s32.totalorder %s32, %s33
      %p47 = scmp.eq.s32.totalorder %s25, 1
      %p48 = por %p46, %p47
      %p50 = scmp.ne.s32.totalorder %s33, %s49
      %p51 = scmp.eq.s32.totalorder %s25, 0
      %p52 = por %p50, %p51
      %s53 = ssub.s32 %s19, %s26
      %p54 = scmp.eq.s32.totalorder %s53, 0
      %s56 = sadd.s32 %s55, 1
      %s57 = scalar_select %p54, %s55, %s56
      %p60 = pneg %p54
      %p61 = scmp.eq.s32.totalorder %s19, 1
      %p62 = por %p60, %p61
      %p63 = scmp.ne.s32.totalorder %s55, %s58
      %p64 = scmp.eq.s32.totalorder %s19, 0
      %p65 = por %p63, %p64
      %p66 = scmp.ne.s32.totalorder %s55, %s58
      %p67 = scmp.eq.s32.totalorder %s24, 1
      %p68 = por %p66, %p67
      %p69 = scmp.ne.s32.totalorder %s58, %s59
      %p70 = scmp.eq.s32.totalorder %s24, 0
      %p71 = por %p69, %p70
      %p72 = scmp.ne.s32.totalorder %s58, %s59
      %p73 = scmp.eq.s32.totalorder %s25, 1
      %p74 = por %p72, %p73
      %p76 = scmp.ne.s32.totalorder %s59, %s75
      %p77 = scmp.eq.s32.totalorder %s25, 0
      %p78 = por %p76, %p77
      %s80 = sadd.s32 %s79, 1
      %p83 = scmp.eq.s32.totalorder %s19, 1
      %p84 = scmp.ne.s32.totalorder %s79, %s81
      %p85 = scmp.eq.s32.totalorder %s19, 0
      %p86 = por %p84, %p85
      %p87 = scmp.ne.s32.totalorder %s79, %s81
      %p88 = scmp.eq.s32.totalorder %s24, 1
      %p89 = por %p87, %p88
      %p90 = scmp.ne.s32.totalorder %s81, %s82
      %p91 = scmp.eq.s32.totalorder %s24, 0
      %p92 = por %p90, %p91
      %p93 = scmp.ne.s32.totalorder %s81, %s82
      %p94 = scmp.eq.s32.totalorder %s25, 1
      %p95 = por %p93, %p94
      %p97 = scmp.ne.s32.totalorder %s82, %s96
      %p98 = scmp.eq.s32.totalorder %s25, 0
      %p99 = por %p97, %p98
      %s101 = sadd.s32 %s100, 1
      %p104 = scmp.eq.s32.totalorder %s19, 1
      %p105 = scmp.ne.s32.totalorder %s100, %s102
      %p106 = scmp.eq.s32.totalorder %s19, 0
      %p107 = por %p105, %p106
      %p108 = scmp.ne.s32.totalorder %s100, %s102
      %p109 = scmp.eq.s32.totalorder %s24, 1
      %p110 = por %p108, %p109
      %p111 = scmp.ne.s32.totalorder %s102, %s103
      %p112 = scmp.eq.s32.totalorder %s24, 0
      %p113 = por %p111, %p112
      %p114 = scmp.ne.s32.totalorder %s102, %s103
      %p115 = scmp.eq.s32.totalorder %s25, 1
      %p116 = por %p114, %p115
      %p118 = scmp.ne.s32.totalorder %s103, %s117
      %p119 = scmp.eq.s32.totalorder %s25, 0
      %p120 = por %p118, %p119
      %s122 = sadd.s32 %s121, 1
      %p125 = scmp.eq.s32.totalorder %s19, 1
      %p126 = scmp.ne.s32.totalorder %s121, %s123
      %p127 = scmp.eq.s32.totalorder %s19, 0
      %p128 = por %p126, %p127
      %p129 = scmp.ne.s32.totalorder %s121, %s123
      %p130 = scmp.eq.s32.totalorder %s24, 1
      %p131 = por %p129, %p130
      %p132 = scmp.ne.s32.totalorder %s123, %s124
      %p133 = scmp.eq.s32.totalorder %s24, 0
      %p134 = por %p132, %p133
      %p135 = scmp.ne.s32.totalorder %s123, %s124
      %p136 = scmp.eq.s32.totalorder %s25, 1
      %p137 = por %p135, %p136
      %p139 = scmp.ne.s32.totalorder %s124, %s138
      %p140 = scmp.eq.s32.totalorder %s25, 0
      %p141 = por %p139, %p140
      %s143 = sadd.s32 %s142, 1
      %p146 = scmp.eq.s32.totalorder %s19, 1
      %p147 = scmp.ne.s32.totalorder %s142, %s144
      %p148 = scmp.eq.s32.totalorder %s19, 0
      %p149 = por %p147, %p148
      %p150 = scmp.ne.s32.totalorder %s142, %s144
      %p151 = scmp.eq.s32.totalorder %s24, 1
      %p152 = por %p150, %p151
      %p153 = scmp.ne.s32.totalorder %s144, %s145
      %p154 = scmp.eq.s32.totalorder %s24, 0
      %p155 = por %p153, %p154
      %p156 = scmp.ne.s32.totalorder %s144, %s145
      %p157 = scmp.eq.s32.totalorder %s25, 1
      %p158 = por %p156, %p157
      %p160 = scmp.ne.s32.totalorder %s145, %s159
      %p161 = scmp.eq.s32.totalorder %s25, 0
      %p162 = por %p160, %p161
      %s164 = sadd.s32 %s163, 1
      %p167 = scmp.eq.s32.totalorder %s19, 1
      %p168 = scmp.ne.s32.totalorder %s163, %s165
      %p169 = scmp.eq.s32.totalorder %s19, 0
      %p170 = por %p168, %p169
      %p171 = scmp.ne.s32.totalorder %s163, %s165
      %p172 = scmp.eq.s32.totalorder %s24, 1
      %p173 = por %p171, %p172
      %p174 = scmp.ne.s32.totalorder %s165, %s166
      %p175 = scmp.eq.s32.totalorder %s24, 0
      %p176 = por %p174, %p175
      %p177 = scmp.ne.s32.totalorder %s165, %s166
      %p178 = scmp.eq.s32.totalorder %s25, 1
      %p179 = por %p177, %p178
      %p181 = scmp.ne.s32.totalorder %s166, %s180
      %p182 = scmp.eq.s32.totalorder %s25, 0
      %p183 = por %p181, %p182
      %s185 = sadd.s32 %s184, 1
      %p188 = scmp.eq.s32.totalorder %s19, 1
      %p189 = scmp.ne.s32.totalorder %s184, %s186
      %p190 = scmp.eq.s32.totalorder %s19, 0
      %p191 = por %p189, %p190
      %p192 = scmp.ne.s32.totalorder %s184, %s186
      %p193 = scmp.eq.s32.totalorder %s24, 1
      %p194 = por %p192, %p193
      %p195 = scmp.ne.s32.totalorder %s186, %s187
      %p196 = scmp.eq.s32.totalorder %s24, 0
      %p197 = por %p195, %p196
      %p198 = scmp.ne.s32.totalorder %s186, %s187
      %p199 = scmp.eq.s32.totalorder %s25, 1
      %p200 = por %p198, %p199
      %p202 = scmp.ne.s32.totalorder %s187, %s201
      %p203 = scmp.eq.s32.totalorder %s25, 0
      %p204 = por %p202, %p203
      %s205 = ssub.s32 %s19, %s26
      %p206 = scmp.eq.s32.totalorder %s205, 0
      %s208 = sadd.s32 %s207, 1
      %s209 = scalar_select %p206, %s207, %s208
      %p212 = pneg %p206
      %p213 = scmp.eq.s32.totalorder %s19, 1
      %p214 = por %p212, %p213
      %p215 = scmp.ne.s32.totalorder %s207, %s210
      %p216 = scmp.eq.s32.totalorder %s19, 0
      %p217 = por %p215, %p216
      %p218 = scmp.ne.s32.totalorder %s207, %s210
      %p219 = scmp.eq.s32.totalorder %s24, 1
      %p220 = por %p218, %p219
      %p221 = scmp.ne.s32.totalorder %s210, %s211
      %p222 = scmp.eq.s32.totalorder %s24, 0
      %p223 = por %p221, %p222
      %p224 = scmp.ne.s32.totalorder %s210, %s211
      %p225 = scmp.eq.s32.totalorder %s25, 1
      %p226 = por %p224, %p225
      %p228 = scmp.ne.s32.totalorder %s211, %s227
      %p229 = scmp.eq.s32.totalorder %s25, 0
      %p230 = por %p228, %p229
      %s231 = ssub.s32 %s19, %s26
      %p232 = scmp.eq.s32.totalorder %s231, 0
      %s234 = sadd.s32 %s233, 1
      %s235 = scalar_select %p232, %s233, %s234
      %p238 = pneg %p232
      %p239 = scmp.eq.s32.totalorder %s19, 1
      %p240 = por %p238, %p239
      %p241 = scmp.ne.s32.totalorder %s233, %s236
      %p242 = scmp.eq.s32.totalorder %s19, 0
      %p243 = por %p241, %p242
      %p244 = scmp.ne.s32.totalorder %s233, %s236
      %p245 = scmp.eq.s32.totalorder %s24, 1
      %p246 = por %p244, %p245
      %p247 = scmp.ne.s32.totalorder %s236, %s237
      %p248 = scmp.eq.s32.totalorder %s24, 0
      %p249 = por %p247, %p248
      %p250 = scmp.ne.s32.totalorder %s236, %s237
      %p251 = scmp.eq.s32.totalorder %s25, 1
      %p252 = por %p250, %p251
      %p254 = scmp.ne.s32.totalorder %s237, %s253
      %p255 = scmp.eq.s32.totalorder %s25, 0
      %p256 = por %p254, %p255
      %p257 = scmp.le.s32.totalorder 1, %s19
      %p258 = scmp.lt.s32.totalorder %s19, 3
      %p259 = pnand %p257, %p258
      %p260 = pneg %p259
      // Predicated region
      $region9: #{decoder_forward.3} parent=5 // pred_check
        _
      $region10: #{decoder_forward.3} parent=5 // pred_check_branch
        %262 = sbr.rel (%p259) target = $region12
      $region11: #{decoder_forward.3} parent=5 // pred_region
        %s263 = ssub.s32 %s19, 1
        // Predicated region
        $region13: #{decoder_forward.3} parent=11 // pred_check
          %p264 = pneg %p92
        $region14: #{decoder_forward.3} parent=11 // pred_check_branch
          %266 = sbr.rel (%p264) target = $region16
        $region15: #{decoder_forward.3} parent=11 // pred_region
          _
        $region16: #{decoder_forward.3} parent=11 // pred_fallthru
          _
        // Predicated region
        $region17: #{decoder_forward.3} parent=11 // pred_check
          %p267 = pneg %p113
        $region18: #{decoder_forward.3} parent=11 // pred_check_branch
          %269 = sbr.rel (%p267) target = $region20
        $region19: #{decoder_forward.3} parent=11 // pred_region
          _
        $region20: #{decoder_forward.3} parent=11 // pred_fallthru
          _
        // Predicated region
        $region21: #{decoder_forward.3} parent=11 // pred_check
          %p270 = pneg %p134
        $region22: #{decoder_forward.3} parent=11 // pred_check_branch
          %272 = sbr.rel (%p270) target = $region24
        $region23: #{decoder_forward.3} parent=11 // pred_region
          _
        $region24: #{decoder_forward.3} parent=11 // pred_fallthru
          _
        // Predicated region
        $region25: #{decoder_forward.3} parent=11 // pred_check
          %p273 = pneg %p155
        $region26: #{decoder_forward.3} parent=11 // pred_check_branch
          %275 = sbr.rel (%p273) target = $region28
        $region27: #{decoder_forward.3} parent=11 // pred_region
          _
        $region28: #{decoder_forward.3} parent=11 // pred_fallthru
          _
        // Predicated region
        $region29: #{decoder_forward.3} parent=11 // pred_check
          %p276 = pneg %p176
        $region30: #{decoder_forward.3} parent=11 // pred_check_branch
          %278 = sbr.rel (%p276) target = $region32
        $region31: #{decoder_forward.3} parent=11 // pred_region
          _
        $region32: #{decoder_forward.3} parent=11 // pred_fallthru
          _
        // Predicated region
        $region33: #{decoder_forward.3} parent=11 // pred_check
          %p279 = pneg %p197
        $region34: #{decoder_forward.3} parent=11 // pred_check_branch
          %281 = sbr.rel (%p279) target = $region36
        $region35: #{decoder_forward.3} parent=11 // pred_region
          _
        $region36: #{decoder_forward.3} parent=11 // pred_fallthru
          _
      $region12: #{decoder_forward.3} parent=5 // pred_fallthru
        _
      %p282 = scmp.lt.s32.totalorder %s19, 2
      // Predicated region
      $region37: #{decoder_forward.3} parent=5 // pred_check
        %p283 = pneg %p282
      $region38: #{decoder_forward.3} parent=5 // pred_check_branch
        %285 = sbr.rel (%p283) target = $region40
      $region39: #{decoder_forward.3} parent=5 // pred_region
        // Predicated region
        $region41: #{decoder_forward.3} parent=39 // pred_check
          %p286 = pneg %p39
        $region42: #{decoder_forward.3} parent=39 // pred_check_branch
          %288 = sbr.rel (%p286) target = $region44
        $region43: #{decoder_forward.3} parent=39 // pred_region
          %p289 = scmp.lt.s32.totalorder %s19, 1
          %s290 = scalar_select %p289, %s19, 1
          %s291 = smul.addr %s290, 8
          %s292 = scalar_lea.vmem %s0, %s291
        $region44: #{decoder_forward.3} parent=39 // pred_fallthru
          _
        // Predicated region
        $region45: #{decoder_forward.3} parent=39 // pred_check
          %p293 = pneg %p65
        $region46: #{decoder_forward.3} parent=39 // pred_check_branch
          %295 = sbr.rel (%p293) target = $region48
        $region47: #{decoder_forward.3} parent=39 // pred_region
          %p296 = scmp.lt.s32.totalorder %s19, 1
          %s297 = scalar_select %p296, %s19, 1
          %s298 = smul.addr %s297, 8
          %s299 = scalar_lea.vmem %s1, %s298
        $region48: #{decoder_forward.3} parent=39 // pred_fallthru
          _
      $region40: #{decoder_forward.3} parent=5 // pred_fallthru
        _
      %p300 = scmp.le.s32.totalorder 1, %s19
      %p301 = scmp.lt.s32.totalorder %s19, 3
      %p302 = pnand %p300, %p301
      %p303 = pneg %p302
      // Predicated region
      $region49: #{decoder_forward.3} parent=5 // pred_check
        _
      $region50: #{decoder_forward.3} parent=5 // pred_check_branch
        %305 = sbr.rel (%p302) target = $region52
      $region51: #{decoder_forward.3} parent=5 // pred_region
        %s306 = ssub.s32 %s19, 1
        %p307 = scmp.lt.s32.totalorder %s24, 1
        %s308 = scalar_select %p307, %s24, 1
        %s309 = smul.addr %s308, 8
        %s310 = scalar_lea.vmem %s0, %s309
        %p311 = pneg %p45
        %p312 = pneg %p42
        %p313 = scmp.lt.s32.totalorder %s24, 1
        %s314 = scalar_select %p313, %s24, 1
        %s315 = smul.addr %s314, 8
        %s316 = scalar_lea.vmem %s1, %s315
        %p317 = pneg %p71
        %p318 = pneg %p68
        %p319 = pneg %p92
        %p320 = pneg %p89
        %p321 = pneg %p113
        %p322 = pneg %p110
        %p323 = pneg %p134
        %p324 = pneg %p131
        %p325 = pneg %p155
        %p326 = pneg %p152
        %p327 = pneg %p176
        %p328 = pneg %p173
        %p329 = pneg %p197
        %p330 = pneg %p194
        %p331 = pneg %p223
        %p332 = pneg %p220
        %s333 = sand.u32 %s210, 1
        %s334 = scalar_lea.sflag [#allocation3], %s333
        %s335 = sand.u32 %s210, 1
        %s336 = smul.addr %s335, 8
        %s337 = scalar_lea.vmem [#allocation2], %s336
        %p338 = pneg %p249
        %p339 = pneg %p246
        %p340 = scmp.lt.s32.totalorder %s24, 1
        %s341 = scalar_select %p340, %s24, 1
        %s342 = smul.addr %s341, 8
        %s343 = scalar_lea.vmem %s9, %s342
        %p344 = scmp.lt.s32.totalorder %s24, 1
        %s345 = scalar_select %p344, %s24, 1
        %s346 = smul.addr %s345, 8
        %s347 = scalar_lea.vmem %s0, %s346
        %p348 = scmp.lt.s32.totalorder %s24, 1
        %s349 = scalar_select %p348, %s24, 1
        %s350 = smul.addr %s349, 8
        %s351 = scalar_lea.vmem %s1, %s350
        %p352 = scmp.lt.s32.totalorder %s24, 1
        %s353 = scalar_select %p352, %s24, 1
        %s354 = smul.addr %s353, 8
        %s355 = scalar_lea.vmem %s9, %s354
        %v357 = vld [vmem:[%s347] sm:$0xff]
        %v358 = vpack.c.bf16 %v357, %v357
        %v359 = vld [vmem:[%s2] sm:$0xff]
        %v360 = vld [vmem:[%s2 + $0x8] sm:$0xff]
        %v361 = vld [vmem:[%s2 + $0x10] sm:$0xff]
        %v362 = vld [vmem:[%s2 + $0x18] sm:$0xff]
        %v363 = vld [vmem:[%s2 + $0x20] sm:$0xff]
        %v364 = vld [vmem:[%s2 + $0x28] sm:$0xff]
        %v365 = vld [vmem:[%s2 + $0x30] sm:$0xff]
        %v366 = vld [vmem:[%s2 + $0x38] sm:$0xff]
        %v367 = vld [vmem:[%s3] sm:$0x3]
        %v369 = vperm.slane %v367, 0
        %v370 = vperm.slane %v367, 1
        %v381 = vunpack.c.l.b16 %v359
        %v382 = vunpack.c.h.b16 %v359
        %v383 = vunpack.c.l.b16 %v360
        %v384 = vunpack.c.h.b16 %v360
        %v385 = vunpack.c.l.b16 %v361
        %v386 = vunpack.c.h.b16 %v361
        %v387 = vunpack.c.l.b16 %v362
        %v388 = vunpack.c.h.b16 %v362
        %v389 = vunpack.c.l.b16 %v363
        %v390 = vunpack.c.h.b16 %v363
        %v391 = vunpack.c.l.b16 %v364
        %v392 = vunpack.c.h.b16 %v364
        %v393 = vunpack.c.l.b16 %v365
        %v394 = vunpack.c.h.b16 %v365
        %v395 = vunpack.c.l.b16 %v366
        %v396 = vunpack.c.h.b16 %v366
        %v397 = vpack.c.b16 %v383, %v381
        %v398 = vpack.c.b16 %v384, %v382
        %v399 = vpack.c.b16 %v387, %v385
        %v400 = vpack.c.b16 %v388, %v386
        %v401 = vpack.c.b16 %v391, %v389
        %v402 = vpack.c.b16 %v392, %v390
        %v403 = vpack.c.b16 %v395, %v393
        %v404 = vpack.c.b16 %v396, %v394
        %vm413 = vcmask 523264
        %v415 = vsel %vm413, %v358, 0
        %417 = vmatpush.bf16.msra.mxu0 0
        %418 = vmatpush.bf16.msra.mxu0 0
        %419 = vmatpush.bf16.msra.mxu0 0
        %420 = vmatpush.bf16.msra.mxu0 0
        %421 = vmatpush.bf16.msra.mxu0 %v403
        %422 = vmatpush.bf16.msra.mxu0 %v401
        %423 = vmatpush.bf16.msra.mxu0 %v399
        %424 = vmatpush.bf16.msra.mxu0 %v397
        %425 = vmatmul.bf16.gmra.mxu0 %v415
        %v426 = vpop.f32.mrf.mxu0
        %v427 = vadd.f32 %v369, %v426
        %v428 = vpop.f32.mrf.mxu0
        %429 = vdwg.mxu0
        %430 = vmatpush.bf16.msra.mxu0 0
        %431 = vmatpush.bf16.msra.mxu0 0
        %432 = vmatpush.bf16.msra.mxu0 0
        %433 = vmatpush.bf16.msra.mxu0 0
        %434 = vmatpush.bf16.msra.mxu0 %v404
        %435 = vmatpush.bf16.msra.mxu0 %v402
        %436 = vmatpush.bf16.msra.mxu0 %v400
        %437 = vmatpush.bf16.msra.mxu0 %v398
        %438 = vmatmul.bf16.gmra.mxu0 %v415
        %v439 = vpop.f32.mrf.mxu0
        %v440 = vadd.f32 %v370, %v439
        %v441 = vpop.f32.mrf.mxu0
        %442 = vdwg.mxu0
        %v443 = vlaneseq
        %v444 = vshrl.u32 %v443, 7
        %v445 = vlaneseq
        %v446 = vand.u32 %v445, 127
        %vm447 = vcmp.gt.s32.totalorder %v446, %v444
        %v448 = vpack.c.bf16 %v427, %v427
        %v449 = vpack.c.bf16 %v440, %v440
        %451 = vrot.lane.b32.xlu0 %v448, 64
        %v452 = vpop.permute.xlu0 %451
        %vm453 = vcmask 130048
        %v455 = vsel %vm453, %v448, 0
        %v458 = vsel %vm453, %v452, 0
        %460 = vmatpush.bf16.xpose.msra.mxu0 0
        %461 = vmatpush.bf16.xpose.msra.mxu0 0
        %462 = vmatpush.bf16.xpose.msra.mxu0 0
        %463 = vmatpush.bf16.xpose.msra.mxu0 0
        %464 = vmatpush.bf16.xpose.msra.mxu0 0
        %465 = vmatpush.bf16.xpose.msra.mxu0 0
        %466 = vmatpush.bf16.xpose.msra.mxu0 0
        %467 = vmatpush.bf16.xpose.msra.mxu0 %v458
        %468 = vmatmul.bf16.gmra.mxu0 %v455
        %v469 = vpop.f32.mrf.mxu0
        %v470 = vadd.f32 0.0, %v469
        %v471 = vpop.f32.mrf.mxu0
        %472 = vdwg.mxu0
        %v473 = vsel %vm447, -1e+09, %v470
        %vm474 = vcmask 64512
        %v475 = vsel %vm474, %v473, -inf
        %476 = vmax.xlane.f32.xlu0 %v475
        %v477 = vpop.xlane.xlu0 %476
        %v478 = vsub.f32 %v473, %v477
        %v479 = vmul.f32 %v478, 1.442695
        %v480 = vpow.pop %v479
        %v481 = vsel %vm474, %v480, 0.0
        %482 = vadd.xlane.f32.xlu0 %v481
        %v483 = vpop.xlane.xlu0 %482
        %v484 = vrcp.pop %v483
        %v485 = vmul.f32 %v480, %v484
        %v486 = vpack.c.bf16 %v485, %v485
        %v488 = vsel %vm474, %v486, 0
        %vm490 = vcmask 1043456
        %v492 = vsel %vm490, %v449, 0
        %494 = vmatpush.bf16.msra.mxu0 0
        %495 = vmatpush.bf16.msra.mxu0 0
        %496 = vmatpush.bf16.msra.mxu0 0
        %497 = vmatpush.bf16.msra.mxu0 0
        %498 = vmatpush.bf16.msra.mxu0 0
        %499 = vmatpush.bf16.msra.mxu0 0
        %500 = vmatpush.bf16.msra.mxu0 0
        %501 = vmatpush.bf16.msra.mxu0 %v492
        %502 = vmatmul.bf16.gmra.mxu0 %v488
        %v503 = vpop.f32.mrf.mxu0
        %v504 = vadd.f32 0.0, %v503
        %v505 = vpop.f32.mrf.mxu0
        %506 = vdwg.mxu0
        %507 = vrot.lane.b32.xlu0 %v448, 112
        %v508 = vpop.permute.xlu0 %507
        %509 = vrot.lane.b32.xlu0 %v448, 48
        %v510 = vpop.permute.xlu0 %509
        %v512 = vsel %vm453, %v508, 0
        %v515 = vsel %vm453, %v510, 0
        %517 = vmatpush.bf16.xpose.msra.mxu0 0
        %518 = vmatpush.bf16.xpose.msra.mxu0 0
        %519 = vmatpush.bf16.xpose.msra.mxu0 0
        %520 = vmatpush.bf16.xpose.msra.mxu0 0
        %521 = vmatpush.bf16.xpose.msra.mxu0 0
        %522 = vmatpush.bf16.xpose.msra.mxu0 0
        %523 = vmatpush.bf16.xpose.msra.mxu0 0
        %524 = vmatpush.bf16.xpose.msra.mxu0 %v515
        %525 = vmatmul.bf16.gmra.mxu0 %v512
        %v526 = vpop.f32.mrf.mxu0
        %v527 = vadd.f32 0.0, %v526
        %v528 = vpop.f32.mrf.mxu0
        %529 = vdwg.mxu0
        %v530 = vsel %vm447, -1e+09, %v527
        %v531 = vsel %vm474, %v530, -inf
        %532 = vmax.xlane.f32.xlu0 %v531
        %v533 = vpop.xlane.xlu0 %532
        %v534 = vsub.f32 %v530, %v533
        %v535 = vmul.f32 %v534, 1.442695
        %v536 = vpow.pop %v535
        %v537 = vsel %vm474, %v536, 0.0
        %538 = vadd.xlane.f32.xlu0 %v537
        %v539 = vpop.xlane.xlu0 %538
        %v540 = vrcp.pop %v539
        %v541 = vmul.f32 %v536, %v540
        %v542 = vpack.c.bf16 %v541, %v541
        %544 = vrot.lane.b32.xlu0 %v449, 112
        %v545 = vpop.permute.xlu0 %544
        %v547 = vsel %vm474, %v542, 0
        %v550 = vsel %vm490, %v545, 0
        %552 = vmatpush.bf16.msra.mxu0 0
        %553 = vmatpush.bf16.msra.mxu0 0
        %554 = vmatpush.bf16.msra.mxu0 0
        %555 = vmatpush.bf16.msra.mxu0 0
        %556 = vmatpush.bf16.msra.mxu0 0
        %557 = vmatpush.bf16.msra.mxu0 0
        %558 = vmatpush.bf16.msra.mxu0 0
        %559 = vmatpush.bf16.msra.mxu0 %v550
        %560 = vmatmul.bf16.gmra.mxu0 %v547
        %v561 = vpop.f32.mrf.mxu0
        %v562 = vadd.f32 0.0, %v561
        %v563 = vpop.f32.mrf.mxu0
        %564 = vdwg.mxu0
        %565 = vrot.lane.b32.xlu0 %v448, 96
        %v566 = vpop.permute.xlu0 %565
        %567 = vrot.lane.b32.xlu0 %v448, 32
        %v568 = vpop.permute.xlu0 %567
        %v570 = vsel %vm453, %v566, 0
        %v573 = vsel %vm453, %v568, 0
        %575 = vmatpush.bf16.xpose.msra.mxu0 0
        %576 = vmatpush.bf16.xpose.msra.mxu0 0
        %577 = vmatpush.bf16.xpose.msra.mxu0 0
        %578 = vmatpush.bf16.xpose.msra.mxu0 0
        %579 = vmatpush.bf16.xpose.msra.mxu0 0
        %580 = vmatpush.bf16.xpose.msra.mxu0 0
        %581 = vmatpush.bf16.xpose.msra.mxu0 0
        %582 = vmatpush.bf16.xpose.msra.mxu0 %v573
        %583 = vmatmul.bf16.gmra.mxu0 %v570
        %v584 = vpop.f32.mrf.mxu0
        %v585 = vadd.f32 0.0, %v584
        %v586 = vpop.f32.mrf.mxu0
        %587 = vdwg.mxu0
        %v588 = vsel %vm447, -1e+09, %v585
        %v589 = vsel %vm474, %v588, -inf
        %590 = vmax.xlane.f32.xlu0 %v589
        %v591 = vpop.xlane.xlu0 %590
        %v592 = vsub.f32 %v588, %v591
        %v593 = vmul.f32 %v592, 1.442695
        %v594 = vpow.pop %v593
        %v595 = vsel %vm474, %v594, 0.0
        %596 = vadd.xlane.f32.xlu0 %v595
        %v597 = vpop.xlane.xlu0 %596
        %v598 = vrcp.pop %v597
        %v599 = vmul.f32 %v594, %v598
        %v600 = vpack.c.bf16 %v599, %v599
        %601 = vrot.lane.b32.xlu0 %v449, 96
        %v602 = vpop.permute.xlu0 %601
        %v604 = vsel %vm474, %v600, 0
        %v607 = vsel %vm490, %v602, 0
        %609 = vmatpush.bf16.msra.mxu0 0
        %610 = vmatpush.bf16.msra.mxu0 0
        %611 = vmatpush.bf16.msra.mxu0 0
        %612 = vmatpush.bf16.msra.mxu0 0
        %613 = vmatpush.bf16.msra.mxu0 0
        %614 = vmatpush.bf16.msra.mxu0 0
        %615 = vmatpush.bf16.msra.mxu0 0
        %616 = vmatpush.bf16.msra.mxu0 %v607
        %617 = vmatmul.bf16.gmra.mxu0 %v604
        %v618 = vpop.f32.mrf.mxu0
        %v619 = vadd.f32 0.0, %v618
        %v620 = vpop.f32.mrf.mxu0
        %621 = vdwg.mxu0
        %622 = vrot.lane.b32.xlu0 %v448, 80
        %v623 = vpop.permute.xlu0 %622
        %624 = vrot.lane.b32.xlu0 %v448, 16
        %v625 = vpop.permute.xlu0 %624
        %v627 = vsel %vm453, %v623, 0
        %v630 = vsel %vm453, %v625, 0
        %632 = vmatpush.bf16.xpose.msra.mxu0 0
        %633 = vmatpush.bf16.xpose.msra.mxu0 0
        %634 = vmatpush.bf16.xpose.msra.mxu0 0
        %635 = vmatpush.bf16.xpose.msra.mxu0 0
        %636 = vmatpush.bf16.xpose.msra.mxu0 0
        %637 = vmatpush.bf16.xpose.msra.mxu0 0
        %638 = vmatpush.bf16.xpose.msra.mxu0 0
        %639 = vmatpush.bf16.xpose.msra.mxu0 %v630
        %640 = vmatmul.bf16.gmra.mxu0 %v627
        %v641 = vpop.f32.mrf.mxu0
        %v642 = vadd.f32 0.0, %v641
        %v643 = vpop.f32.mrf.mxu0
        %644 = vdwg.mxu0
        %v645 = vsel %vm447, -1e+09, %v642
        %v646 = vsel %vm474, %v645, -inf
        %647 = vmax.xlane.f32.xlu0 %v646
        %v648 = vpop.xlane.xlu0 %647
        %v649 = vsub.f32 %v645, %v648
        %v650 = vmul.f32 %v649, 1.442695
        %v651 = vpow.pop %v650
        %v652 = vsel %vm474, %v651, 0.0
        %653 = vadd.xlane.f32.xlu0 %v652
        %v654 = vpop.xlane.xlu0 %653
        %v655 = vrcp.pop %v654
        %v656 = vmul.f32 %v651, %v655
        %v657 = vpack.c.bf16 %v656, %v656
        %658 = vrot.lane.b32.xlu0 %v449, 80
        %v659 = vpop.permute.xlu0 %658
        %v661 = vsel %vm474, %v657, 0
        %v664 = vsel %vm490, %v659, 0
        %666 = vmatpush.bf16.msra.mxu0 0
        %667 = vmatpush.bf16.msra.mxu0 0
        %668 = vmatpush.bf16.msra.mxu0 0
        %669 = vmatpush.bf16.msra.mxu0 0
        %670 = vmatpush.bf16.msra.mxu0 0
        %671 = vmatpush.bf16.msra.mxu0 0
        %672 = vmatpush.bf16.msra.mxu0 0
        %673 = vmatpush.bf16.msra.mxu0 %v664
        %674 = vmatmul.bf16.gmra.mxu0 %v661
        %v675 = vpop.f32.mrf.mxu0
        %v676 = vadd.f32 0.0, %v675
        %v677 = vpop.f32.mrf.mxu0
        %678 = vdwg.mxu0
        %680 = vrot.lane.b32.xlu0 %v562, 16
        %v681 = vpop.permute.xlu0 %680
        %684 = vrot.lane.b32.xlu0 %v619, 32
        %v685 = vpop.permute.xlu0 %684
        %688 = vrot.lane.b32.xlu0 %v676, 48
        %v689 = vpop.permute.xlu0 %688
        %v691 = vsel %vm453, %v504, %v681
        %vm692 = vcmask 261120
        %v693 = vsel %vm692, %v691, %v685
        %vm694 = vcmask 392192
        %v695 = vsel %vm694, %v693, %v689
        %v696 = vpack.c.bf16 %v695, %v695
        %v697 = vld [vmem:[%s4] sm:$0xf]
        %v698 = vld [vmem:[%s4 + $0x4] sm:$0xf]
        %v699 = vld [vmem:[%s4 + $0x8] sm:$0xf]
        %v700 = vld [vmem:[%s4 + $0xc] sm:$0xf]
        %v701 = vld [vmem:[%s4 + $0x10] sm:$0xf]
        %v702 = vld [vmem:[%s4 + $0x14] sm:$0xf]
        %v703 = vld [vmem:[%s4 + $0x18] sm:$0xf]
        %v704 = vld [vmem:[%s4 + $0x1c] sm:$0xf]
        %v705 = vld [vmem:[%s5] sm:$0x1]
        %v707 = vperm.slane %v705, 0
        %v717 = vunpack.c.l.b16 %v697
        %v718 = vunpack.c.l.b16 %v698
        %v719 = vunpack.c.l.b16 %v699
        %v720 = vunpack.c.l.b16 %v700
        %v721 = vunpack.c.l.b16 %v701
        %v722 = vunpack.c.l.b16 %v702
        %v723 = vunpack.c.l.b16 %v703
        %v724 = vunpack.c.l.b16 %v704
        %v725 = vpack.c.b16 %v718, %v717
        %v726 = vpack.c.b16 %v720, %v719
        %v727 = vpack.c.b16 %v722, %v721
        %v728 = vpack.c.b16 %v724, %v723
        %v734 = vsel %vm413, %v696, 0
        %736 = vmatpush.bf16.msra.mxu0 0
        %737 = vmatpush.bf16.msra.mxu0 0
        %738 = vmatpush.bf16.msra.mxu0 0
        %739 = vmatpush.bf16.msra.mxu0 0
        %740 = vmatpush.bf16.msra.mxu0 %v728
        %741 = vmatpush.bf16.msra.mxu0 %v727
        %742 = vmatpush.bf16.msra.mxu0 %v726
        %743 = vmatpush.bf16.msra.mxu0 %v725
        %744 = vmatmul.bf16.gmra.mxu0 %v734
        %v745 = vpop.f32.mrf.mxu0
        %v746 = vadd.f32 %v707, %v745
        %v747 = vpop.f32.mrf.mxu0
        %748 = vdwg.mxu0
        %749 = vst.msk [vmem:[%s337] sm:$0xff] %vm413, %v746
        %v750 = vadd.f32 %v746, %v357
        %v751 = vsel %vm413, %v750, 0.0
        %752 = vadd.xlane.f32.xlu0 %v751
        %v753 = vpop.xlane.xlu0 %752
        %v754 = vrcp.pop 64.0
        %v755 = vmul.f32 64.0, %v754
        %v756 = vsub.f32 1.0, %v755
        %v757 = vmul.f32 %v754, %v756
        %v758 = vadd.f32 %v754, %v757
        %vm759 = vweird.f32 %v754
        %v760 = vsel %vm759, %v754, %v758
        %v761 = vmul.f32 %v753, %v760
        %v762 = vsub.f32 %v750, %v761
        %v763 = vmul.f32 %v762, %v762
        %v764 = vsel %vm413, %v763, 0.0
        %765 = vadd.xlane.f32.xlu0 %v764
        %v766 = vpop.xlane.xlu0 %765
        %v767 = vmul.f32 %v766, %v760
        %v768 = vadd.f32 %v767, 1e-05
        %v769 = vrsqrt.pop %v768
        %v770 = vmul.f32 %v769, %v768
        %v771 = vmul.f32 %v770, %v769
        %v772 = vmul.f32 0.5, %v771
        %v773 = vsub.f32 1.5, %v772
        %v774 = vmul.f32 %v769, %v773
        %vm775 = vweird.f32 %v768
        %vm776 = vweird.f32 %v769
        %vm777 = vmor %vm775, %vm776
        %v778 = vsel %vm777, %v769, %v774
        %v779 = vmul.f32 %v762, %v778
        %v780 = vld [vmem:[%s6] sm:$0x1]
        %v782 = vperm.slane %v780, 0
        %v784 = vmul.f32 %v779, %v782
        %v785 = vld [vmem:[%s7] sm:$0x1]
        %v787 = vperm.slane %v785, 0
        %v789 = vadd.f32 %v784, %v787
        %790 = vst.msk [vmem:[%s355] sm:$0xff] %vm413, %v789
        %s791 = sand.u32 %s210, 1
        %s792 = scalar_lea.sflag [#allocation3], %s791
        %s793 = sand.u32 %s210, 1
        %s794 = smul.addr %s793, 8
        %s795 = scalar_lea.vmem [#allocation2], %s794
        %p796 = scmp.lt.s32.totalorder %s24, 1
        %s797 = scalar_select %p796, %s24, 1
        %s798 = smul.addr %s797, 8
        %s799 = scalar_lea.vmem %s9, %s798
        // Predicated region
        $region53: #{decoder_forward.3} parent=51 // pred_check
          %p800 = pneg %p220
        $region54: #{decoder_forward.3} parent=51 // pred_check_branch
          %802 = sbr.rel (%p800) target = $region56
        $region55: #{decoder_forward.3} parent=51 // pred_region
          %804 = vsyncadd %s792, 0
          %s805 = smul.addr %s24, 8
          %s806 = scalar_lea.hbm %s8, %s805
          %s808 = sshll.u32 %s795, 4
          %s809 = int_to_ptr.vmem [resolvable:$true] %s808
          %s810 = sshll.u32 %s806, 4
          %s811 = int_to_ptr.hbm [resolvable:$true] %s810
          %813 = dma.vmem_to_hbm [thread:$0]  %s809, 128, %s811, %s792
        $region56: #{decoder_forward.3} parent=51 // pred_fallthru
          _
        // Predicated region
        $region57: #{decoder_forward.3} parent=51 // pred_check
          %p814 = pneg %p246
        $region58: #{decoder_forward.3} parent=51 // pred_check_branch
          %816 = sbr.rel (%p814) target = $region60
        $region59: #{decoder_forward.3} parent=51 // pred_region
          _
        $region60: #{decoder_forward.3} parent=51 // pred_fallthru
          _
      $region52: #{decoder_forward.3} parent=5 // pred_fallthru
        _
      %p817 = scmp.le.s32.totalorder 2, %s19
      // Predicated region
      $region61: #{decoder_forward.3} parent=5 // pred_check
        %p818 = pneg %p817
      $region62: #{decoder_forward.3} parent=5 // pred_check_branch
        %820 = sbr.rel (%p818) target = $region64
      $region63: #{decoder_forward.3} parent=5 // pred_region
        %s821 = ssub.s32 %s19, 2
        // Predicated region
        $region65: #{decoder_forward.3} parent=63 // pred_check
          %p822 = pneg %p226
        $region66: #{decoder_forward.3} parent=63 // pred_check_branch
          %824 = sbr.rel (%p822) target = $region68
        $region67: #{decoder_forward.3} parent=63 // pred_region
          %s825 = sand.u32 %s211, 1
          %s826 = scalar_lea.sflag [#allocation3], %s825
          %s827 = sand.u32 %s211, 1
          %s828 = smul.addr %s827, 8
          %s829 = scalar_lea.vmem [#allocation2], %s828
          %831 = dma.done %s826, 128
        $region68: #{decoder_forward.3} parent=63 // pred_fallthru
          _
        // Predicated region
        $region69: #{decoder_forward.3} parent=63 // pred_check
          %p832 = pneg %p252
        $region70: #{decoder_forward.3} parent=63 // pred_check_branch
          %834 = sbr.rel (%p832) target = $region72
        $region71: #{decoder_forward.3} parent=63 // pred_region
          %p835 = scmp.lt.s32.totalorder %s25, 1
          %s836 = scalar_select %p835, %s25, 1
          %s837 = smul.addr %s836, 8
          %s838 = scalar_lea.vmem %s9, %s837
        $region72: #{decoder_forward.3} parent=63 // pred_fallthru
          _
      $region64: #{decoder_forward.3} parent=5 // pred_fallthru
        _
    $region6: #{decoder_forward.3} parent=1 // loop_footer
      %s23 = sadd.s32 1, %s19
    $region7: #{decoder_forward.3} parent=1 // loop_footer_branch
      %18 = sbr.rel target = $region3
    $region8: #{decoder_forward.3} parent=1 // loop_exit
      _
    %839 = vsyncpa [#allocation3], 1
    %s840 = scalar_lea.sflag [#allocation3], 1
    %841 = vsyncpa %s840, 1

// kernel: decoder_forward.4
$region0: #{decoder_forward.4}
  #allocation0 [shape = 'u32[]', space=smem, size = 0x4, offset = 0x4, fixed_abs, tag = 'smem constant byte address 0x4 - core index']
  #allocation1 [shape = 'u32[72,128]{1,0:T(1,128)}', space=vmem, size = 0x9000, scoped, tag = 'internal scratch']
  %s0 = inlined_call_operand.vmem [shape: f32[2,8,64], index: 0, kind: input, shape index: {}]
  %s1 = inlined_call_operand.vmem [shape: f32[2,8,64], index: 1, kind: input, shape index: {}]
  %s2 = inlined_call_operand.vmem [shape: bf16[64,192], index: 2, kind: input, shape index: {}]
  %s3 = inlined_call_operand.vmem [shape: f32[1,192], index: 3, kind: input, shape index: {}]
  %s4 = inlined_call_operand.vmem [shape: bf16[64,64], index: 4, kind: input, shape index: {}]
  %s5 = inlined_call_operand.vmem [shape: f32[1,64], index: 5, kind: input, shape index: {}]
  %s6 = inlined_call_operand.vmem [shape: f32[1,64], index: 6, kind: input, shape index: {}]
  %s7 = inlined_call_operand.vmem [shape: f32[1,64], index: 7, kind: input, shape index: {}]
  %s8 = inlined_call_operand.vmem [shape: f32[2,8,64], index: 8, kind: output, shape index: {0}]
  %s9 = inlined_call_operand.vmem [shape: f32[2,8,64], index: 9, kind: output, shape index: {1}]
  %10 = xla_tuple %s8, %s9
  %s11 = sld [smem:[#allocation0]]
  $region73: #{decoder_forward.4} parent=0
    _
  %s13 = ssub.s32 1, %s11
  %s14 = scalar_select 0, %s13, %s11
  loop: start=0, step=1, limit=4
  $region2: #{decoder_forward.4} parent=0 // loop_pre_header
    _
  $region3: #{decoder_forward.4} parent=0 // loop_header
    %s16 = sphi 0, %s20
    %p17 = scmp.ge.s32.totalorder %s16, 4
    %s26 = sphi 0, %s28
    %s29 = sphi 0, %s26
    %s30 = sphi 0, %s29
    %s46 = sphi 0, %s30
    %s52 = sphi 0, %s54
    %s55 = sphi 0, %s52
    %s56 = sphi 0, %s55
    %s72 = sphi 0, %s56
    %s76 = sphi 0, %s76
    %s78 = sphi 0, %s76
    %s79 = sphi 0, %s78
    %s93 = sphi 0, %s79
    %s97 = sphi 0, %s97
    %s99 = sphi 0, %s97
    %s100 = sphi 0, %s99
    %s114 = sphi 0, %s100
    %s118 = sphi 0, %s118
    %s120 = sphi 0, %s118
    %s121 = sphi 0, %s120
    %s135 = sphi 0, %s121
    %s139 = sphi 0, %s139
    %s141 = sphi 0, %s139
    %s142 = sphi 0, %s141
    %s156 = sphi 0, %s142
    %s160 = sphi 0, %s160
    %s162 = sphi 0, %s160
    %s163 = sphi 0, %s162
    %s177 = sphi 0, %s163
    %s181 = sphi 0, %s181
    %s183 = sphi 0, %s181
    %s184 = sphi 0, %s183
    %s198 = sphi 0, %s184
    %s204 = sphi 0, %s206
    %s207 = sphi 0, %s204
    %s208 = sphi 0, %s207
    %s224 = sphi 0, %s208
    %s230 = sphi 0, %s232
    %s233 = sphi 0, %s230
    %s234 = sphi 0, %s233
    %s250 = sphi 0, %s234
  $region4: #{decoder_forward.4} parent=0 // loop_header_branch
    %19 = sbr.rel (%p17) target = $region8
  $region5: #{decoder_forward.4} parent=0 // loop_body
    %s21 = ssub.s32 %s16, 1
    %s22 = ssub.s32 %s16, 2
    %s23 = sadd.s32 %s16, 1
    %s24 = ssub.s32 %s16, %s23
    %p25 = scmp.eq.s32.totalorder %s24, 0
    %s27 = sadd.s32 %s26, 1
    %s28 = scalar_select %p25, %s26, %s27
    %p31 = pneg %p25
    %p32 = scmp.eq.s32.totalorder %s16, 1
    %p33 = por %p31, %p32
    %p34 = scmp.ne.s32.totalorder %s26, %s29
    %p35 = scmp.eq.s32.totalorder %s16, 0
    %p36 = por %p34, %p35
    %p37 = scmp.ne.s32.totalorder %s26, %s29
    %p38 = scmp.eq.s32.totalorder %s21, 1
    %p39 = por %p37, %p38
    %p40 = scmp.ne.s32.totalorder %s29, %s30
    %p41 = scmp.eq.s32.totalorder %s21, 0
    %p42 = por %p40, %p41
    %p43 = scmp.ne.s32.totalorder %s29, %s30
    %p44 = scmp.eq.s32.totalorder %s22, 1
    %p45 = por %p43, %p44
    %p47 = scmp.ne.s32.totalorder %s30, %s46
    %p48 = scmp.eq.s32.totalorder %s22, 0
    %p49 = por %p47, %p48
    %s50 = ssub.s32 %s16, %s23
    %p51 = scmp.eq.s32.totalorder %s50, 0
    %s53 = sadd.s32 %s52, 1
    %s54 = scalar_select %p51, %s52, %s53
    %p57 = pneg %p51
    %p58 = scmp.eq.s32.totalorder %s16, 1
    %p59 = por %p57, %p58
    %p60 = scmp.ne.s32.totalorder %s52, %s55
    %p61 = scmp.eq.s32.totalorder %s16, 0
    %p62 = por %p60, %p61
    %p63 = scmp.ne.s32.totalorder %s52, %s55
    %p64 = scmp.eq.s32.totalorder %s21, 1
    %p65 = por %p63, %p64
    %p66 = scmp.ne.s32.totalorder %s55, %s56
    %p67 = scmp.eq.s32.totalorder %s21, 0
    %p68 = por %p66, %p67
    %p69 = scmp.ne.s32.totalorder %s55, %s56
    %p70 = scmp.eq.s32.totalorder %s22, 1
    %p71 = por %p69, %p70
    %p73 = scmp.ne.s32.totalorder %s56, %s72
    %p74 = scmp.eq.s32.totalorder %s22, 0
    %p75 = por %p73, %p74
    %s77 = sadd.s32 %s76, 1
    %p80 = scmp.eq.s32.totalorder %s16, 1
    %p81 = scmp.ne.s32.totalorder %s76, %s78
    %p82 = scmp.eq.s32.totalorder %s16, 0
    %p83 = por %p81, %p82
    %p84 = scmp.ne.s32.totalorder %s76, %s78
    %p85 = scmp.eq.s32.totalorder %s21, 1
    %p86 = por %p84, %p85
    %p87 = scmp.ne.s32.totalorder %s78, %s79
    %p88 = scmp.eq.s32.totalorder %s21, 0
    %p89 = por %p87, %p88
    %p90 = scmp.ne.s32.totalorder %s78, %s79
    %p91 = scmp.eq.s32.totalorder %s22, 1
    %p92 = por %p90, %p91
    %p94 = scmp.ne.s32.totalorder %s79, %s93
    %p95 = scmp.eq.s32.totalorder %s22, 0
    %p96 = por %p94, %p95
    %s98 = sadd.s32 %s97, 1
    %p101 = scmp.eq.s32.totalorder %s16, 1
    %p102 = scmp.ne.s32.totalorder %s97, %s99
    %p103 = scmp.eq.s32.totalorder %s16, 0
    %p104 = por %p102, %p103
    %p105 = scmp.ne.s32.totalorder %s97, %s99
    %p106 = scmp.eq.s32.totalorder %s21, 1
    %p107 = por %p105, %p106
    %p108 = scmp.ne.s32.totalorder %s99, %s100
    %p109 = scmp.eq.s32.totalorder %s21, 0
    %p110 = por %p108, %p109
    %p111 = scmp.ne.s32.totalorder %s99, %s100
    %p112 = scmp.eq.s32.totalorder %s22, 1
    %p113 = por %p111, %p112
    %p115 = scmp.ne.s32.totalorder %s100, %s114
    %p116 = scmp.eq.s32.totalorder %s22, 0
    %p117 = por %p115, %p116
    %s119 = sadd.s32 %s118, 1
    %p122 = scmp.eq.s32.totalorder %s16, 1
    %p123 = scmp.ne.s32.totalorder %s118, %s120
    %p124 = scmp.eq.s32.totalorder %s16, 0
    %p125 = por %p123, %p124
    %p126 = scmp.ne.s32.totalorder %s118, %s120
    %p127 = scmp.eq.s32.totalorder %s21, 1
    %p128 = por %p126, %p127
    %p129 = scmp.ne.s32.totalorder %s120, %s121
    %p130 = scmp.eq.s32.totalorder %s21, 0
    %p131 = por %p129, %p130
    %p132 = scmp.ne.s32.totalorder %s120, %s121
    %p133 = scmp.eq.s32.totalorder %s22, 1
    %p134 = por %p132, %p133
    %p136 = scmp.ne.s32.totalorder %s121, %s135
    %p137 = scmp.eq.s32.totalorder %s22, 0
    %p138 = por %p136, %p137
    %s140 = sadd.s32 %s139, 1
    %p143 = scmp.eq.s32.totalorder %s16, 1
    %p144 = scmp.ne.s32.totalorder %s139, %s141
    %p145 = scmp.eq.s32.totalorder %s16, 0
    %p146 = por %p144, %p145
    %p147 = scmp.ne.s32.totalorder %s139, %s141
    %p148 = scmp.eq.s32.totalorder %s21, 1
    %p149 = por %p147, %p148
    %p150 = scmp.ne.s32.totalorder %s141, %s142
    %p151 = scmp.eq.s32.totalorder %s21, 0
    %p152 = por %p150, %p151
    %p153 = scmp.ne.s32.totalorder %s141, %s142
    %p154 = scmp.eq.s32.totalorder %s22, 1
    %p155 = por %p153, %p154
    %p157 = scmp.ne.s32.totalorder %s142, %s156
    %p158 = scmp.eq.s32.totalorder %s22, 0
    %p159 = por %p157, %p158
    %s161 = sadd.s32 %s160, 1
    %p164 = scmp.eq.s32.totalorder %s16, 1
    %p165 = scmp.ne.s32.totalorder %s160, %s162
    %p166 = scmp.eq.s32.totalorder %s16, 0
    %p167 = por %p165, %p166
    %p168 = scmp.ne.s32.totalorder %s160, %s162
    %p169 = scmp.eq.s32.totalorder %s21, 1
    %p170 = por %p168, %p169
    %p171 = scmp.ne.s32.totalorder %s162, %s163
    %p172 = scmp.eq.s32.totalorder %s21, 0
    %p173 = por %p171, %p172
    %p174 = scmp.ne.s32.totalorder %s162, %s163
    %p175 = scmp.eq.s32.totalorder %s22, 1
    %p176 = por %p174, %p175
    %p178 = scmp.ne.s32.totalorder %s163, %s177
    %p179 = scmp.eq.s32.totalorder %s22, 0
    %p180 = por %p178, %p179
    %s182 = sadd.s32 %s181, 1
    %p185 = scmp.eq.s32.totalorder %s16, 1
    %p186 = scmp.ne.s32.totalorder %s181, %s183
    %p187 = scmp.eq.s32.totalorder %s16, 0
    %p188 = por %p186, %p187
    %p189 = scmp.ne.s32.totalorder %s181, %s183
    %p190 = scmp.eq.s32.totalorder %s21, 1
    %p191 = por %p189, %p190
    %p192 = scmp.ne.s32.totalorder %s183, %s184
    %p193 = scmp.eq.s32.totalorder %s21, 0
    %p194 = por %p192, %p193
    %p195 = scmp.ne.s32.totalorder %s183, %s184
    %p196 = scmp.eq.s32.totalorder %s22, 1
    %p197 = por %p195, %p196
    %p199 = scmp.ne.s32.totalorder %s184, %s198
    %p200 = scmp.eq.s32.totalorder %s22, 0
    %p201 = por %p199, %p200
    %s202 = ssub.s32 %s16, %s23
    %p203 = scmp.eq.s32.totalorder %s202, 0
    %s205 = sadd.s32 %s204, 1
    %s206 = scalar_select %p203, %s204, %s205
    %p209 = pneg %p203
    %p210 = scmp.eq.s32.totalorder %s16, 1
    %p211 = por %p209, %p210
    %p212 = scmp.ne.s32.totalorder %s204, %s207
    %p213 = scmp.eq.s32.totalorder %s16, 0
    %p214 = por %p212, %p213
    %p215 = scmp.ne.s32.totalorder %s204, %s207
    %p216 = scmp.eq.s32.totalorder %s21, 1
    %p217 = por %p215, %p216
    %p218 = scmp.ne.s32.totalorder %s207, %s208
    %p219 = scmp.eq.s32.totalorder %s21, 0
    %p220 = por %p218, %p219
    %p221 = scmp.ne.s32.totalorder %s207, %s208
    %p222 = scmp.eq.s32.totalorder %s22, 1
    %p223 = por %p221, %p222
    %p225 = scmp.ne.s32.totalorder %s208, %s224
    %p226 = scmp.eq.s32.totalorder %s22, 0
    %p227 = por %p225, %p226
    %s228 = ssub.s32 %s16, %s23
    %p229 = scmp.eq.s32.totalorder %s228, 0
    %s231 = sadd.s32 %s230, 1
    %s232 = scalar_select %p229, %s230, %s231
    %p235 = pneg %p229
    %p236 = scmp.eq.s32.totalorder %s16, 1
    %p237 = por %p235, %p236
    %p238 = scmp.ne.s32.totalorder %s230, %s233
    %p239 = scmp.eq.s32.totalorder %s16, 0
    %p240 = por %p238, %p239
    %p241 = scmp.ne.s32.totalorder %s230, %s233
    %p242 = scmp.eq.s32.totalorder %s21, 1
    %p243 = por %p241, %p242
    %p244 = scmp.ne.s32.totalorder %s233, %s234
    %p245 = scmp.eq.s32.totalorder %s21, 0
    %p246 = por %p244, %p245
    %p247 = scmp.ne.s32.totalorder %s233, %s234
    %p248 = scmp.eq.s32.totalorder %s22, 1
    %p249 = por %p247, %p248
    %p251 = scmp.ne.s32.totalorder %s234, %s250
    %p252 = scmp.eq.s32.totalorder %s22, 0
    %p253 = por %p251, %p252
    %p254 = scmp.le.s32.totalorder 1, %s16
    %p255 = scmp.lt.s32.totalorder %s16, 3
    %p256 = pnand %p254, %p255
    %p257 = pneg %p256
    // Predicated region
    $region9: #{decoder_forward.4} parent=5 // pred_check
      _
    $region10: #{decoder_forward.4} parent=5 // pred_check_branch
      %259 = sbr.rel (%p256) target = $region12
    $region11: #{decoder_forward.4} parent=5 // pred_region
      %s260 = ssub.s32 %s16, 1
      // Predicated region
      $region13: #{decoder_forward.4} parent=11 // pred_check
        %p261 = pneg %p89
      $region14: #{decoder_forward.4} parent=11 // pred_check_branch
        %263 = sbr.rel (%p261) target = $region16
      $region15: #{decoder_forward.4} parent=11 // pred_region
        _
      $region16: #{decoder_forward.4} parent=11 // pred_fallthru
        _
      // Predicated region
      $region17: #{decoder_forward.4} parent=11 // pred_check
        %p264 = pneg %p110
      $region18: #{decoder_forward.4} parent=11 // pred_check_branch
        %266 = sbr.rel (%p264) target = $region20
      $region19: #{decoder_forward.4} parent=11 // pred_region
        _
      $region20: #{decoder_forward.4} parent=11 // pred_fallthru
        _
      // Predicated region
      $region21: #{decoder_forward.4} parent=11 // pred_check
        %p267 = pneg %p131
      $region22: #{decoder_forward.4} parent=11 // pred_check_branch
        %269 = sbr.rel (%p267) target = $region24
      $region23: #{decoder_forward.4} parent=11 // pred_region
        _
      $region24: #{decoder_forward.4} parent=11 // pred_fallthru
        _
      // Predicated region
      $region25: #{decoder_forward.4} parent=11 // pred_check
        %p270 = pneg %p152
      $region26: #{decoder_forward.4} parent=11 // pred_check_branch
        %272 = sbr.rel (%p270) target = $region28
      $region27: #{decoder_forward.4} parent=11 // pred_region
        _
      $region28: #{decoder_forward.4} parent=11 // pred_fallthru
        _
      // Predicated region
      $region29: #{decoder_forward.4} parent=11 // pred_check
        %p273 = pneg %p173
      $region30: #{decoder_forward.4} parent=11 // pred_check_branch
        %275 = sbr.rel (%p273) target = $region32
      $region31: #{decoder_forward.4} parent=11 // pred_region
        _
      $region32: #{decoder_forward.4} parent=11 // pred_fallthru
        _
      // Predicated region
      $region33: #{decoder_forward.4} parent=11 // pred_check
        %p276 = pneg %p194
      $region34: #{decoder_forward.4} parent=11 // pred_check_branch
        %278 = sbr.rel (%p276) target = $region36
      $region35: #{decoder_forward.4} parent=11 // pred_region
        _
      $region36: #{decoder_forward.4} parent=11 // pred_fallthru
        _
    $region12: #{decoder_forward.4} parent=5 // pred_fallthru
      _
    %p279 = scmp.lt.s32.totalorder %s16, 2
    // Predicated region
    $region37: #{decoder_forward.4} parent=5 // pred_check
      %p280 = pneg %p279
    $region38: #{decoder_forward.4} parent=5 // pred_check_branch
      %282 = sbr.rel (%p280) target = $region40
    $region39: #{decoder_forward.4} parent=5 // pred_region
      // Predicated region
      $region41: #{decoder_forward.4} parent=39 // pred_check
        %p283 = pneg %p36
      $region42: #{decoder_forward.4} parent=39 // pred_check_branch
        %285 = sbr.rel (%p283) target = $region44
      $region43: #{decoder_forward.4} parent=39 // pred_region
        %p286 = scmp.lt.s32.totalorder %s16, 1
        %s287 = scalar_select %p286, %s16, 1
        %s288 = smul.addr %s287, 8
        %s289 = scalar_lea.vmem %s0, %s288
      $region44: #{decoder_forward.4} parent=39 // pred_fallthru
        _
      // Predicated region
      $region45: #{decoder_forward.4} parent=39 // pred_check
        %p290 = pneg %p62
      $region46: #{decoder_forward.4} parent=39 // pred_check_branch
        %292 = sbr.rel (%p290) target = $region48
      $region47: #{decoder_forward.4} parent=39 // pred_region
        %p293 = scmp.lt.s32.totalorder %s16, 1
        %s294 = scalar_select %p293, %s16, 1
        %s295 = smul.addr %s294, 8
        %s296 = scalar_lea.vmem %s1, %s295
      $region48: #{decoder_forward.4} parent=39 // pred_fallthru
        _
    $region40: #{decoder_forward.4} parent=5 // pred_fallthru
      _
    %p297 = scmp.le.s32.totalorder 1, %s16
    %p298 = scmp.lt.s32.totalorder %s16, 3
    %p299 = pnand %p297, %p298
    %p300 = pneg %p299
    // Predicated region
    $region49: #{decoder_forward.4} parent=5 // pred_check
      _
    $region50: #{decoder_forward.4} parent=5 // pred_check_branch
      %302 = sbr.rel (%p299) target = $region52
    $region51: #{decoder_forward.4} parent=5 // pred_region
      %s303 = ssub.s32 %s16, 1
      %p304 = scmp.lt.s32.totalorder %s21, 1
      %s305 = scalar_select %p304, %s21, 1
      %s306 = smul.addr %s305, 8
      %s307 = scalar_lea.vmem %s0, %s306
      %p308 = pneg %p42
      %p309 = pneg %p39
      %p310 = scmp.lt.s32.totalorder %s21, 1
      %s311 = scalar_select %p310, %s21, 1
      %s312 = smul.addr %s311, 8
      %s313 = scalar_lea.vmem %s1, %s312
      %p314 = pneg %p68
      %p315 = pneg %p65
      %p316 = pneg %p89
      %p317 = pneg %p86
      %p318 = pneg %p110
      %p319 = pneg %p107
      %p320 = pneg %p131
      %p321 = pneg %p128
      %p322 = pneg %p152
      %p323 = pneg %p149
      %p324 = pneg %p173
      %p325 = pneg %p170
      %p326 = pneg %p194
      %p327 = pneg %p191
      %p328 = pneg %p220
      %p329 = pneg %p217
      %p330 = scmp.lt.s32.totalorder %s21, 1
      %s331 = scalar_select %p330, %s21, 1
      %s332 = smul.addr %s331, 8
      %s333 = scalar_lea.vmem %s8, %s332
      %p334 = pneg %p246
      %p335 = pneg %p243
      %p336 = scmp.lt.s32.totalorder %s21, 1
      %s337 = scalar_select %p336, %s21, 1
      %s338 = smul.addr %s337, 8
      %s339 = scalar_lea.vmem %s9, %s338
      %p340 = scmp.lt.s32.totalorder %s21, 1
      %s341 = scalar_select %p340, %s21, 1
      %s342 = smul.addr %s341, 8
      %s343 = scalar_lea.vmem %s0, %s342
      %p344 = scmp.lt.s32.totalorder %s21, 1
      %s345 = scalar_select %p344, %s21, 1
      %s346 = smul.addr %s345, 8
      %s347 = scalar_lea.vmem %s1, %s346
      %p348 = scmp.lt.s32.totalorder %s21, 1
      %s349 = scalar_select %p348, %s21, 1
      %s350 = smul.addr %s349, 8
      %s351 = scalar_lea.vmem %s8, %s350
      %p352 = scmp.lt.s32.totalorder %s21, 1
      %s353 = scalar_select %p352, %s21, 1
      %s354 = smul.addr %s353, 8
      %s355 = scalar_lea.vmem %s9, %s354
      %v357 = vld [vmem:[%s343] sm:$0xff]
      %v358 = vpack.c.bf16 %v357, %v357
      %v359 = vld [vmem:[%s2] sm:$0xff]
      %v360 = vld [vmem:[%s2 + $0x8] sm:$0xff]
      %v361 = vld [vmem:[%s2 + $0x10] sm:$0xff]
      %v362 = vld [vmem:[%s2 + $0x18] sm:$0xff]
      %v363 = vld [vmem:[%s2 + $0x20] sm:$0xff]
      %v364 = vld [vmem:[%s2 + $0x28] sm:$0xff]
      %v365 = vld [vmem:[%s2 + $0x30] sm:$0xff]
      %v366 = vld [vmem:[%s2 + $0x38] sm:$0xff]
      %v367 = vld [vmem:[%s3] sm:$0x3]
      %v368 = vld [vmem:[%s347] sm:$0xff]
      %v369 = vpack.c.bf16 %v368, %v368
      %v371 = vperm.slane %v367, 0
      %v381 = vunpack.c.l.b16 %v359
      %v382 = vunpack.c.l.b16 %v360
      %v383 = vunpack.c.l.b16 %v361
      %v384 = vunpack.c.l.b16 %v362
      %v385 = vunpack.c.l.b16 %v363
      %v386 = vunpack.c.l.b16 %v364
      %v387 = vunpack.c.l.b16 %v365
      %v388 = vunpack.c.l.b16 %v366
      %v389 = vpack.c.b16 %v382, %v381
      %v390 = vpack.c.b16 %v384, %v383
      %v391 = vpack.c.b16 %v386, %v385
      %v392 = vpack.c.b16 %v388, %v387
      %vm397 = vcmask 523264
      %v399 = vsel %vm397, %v358, 0
      %401 = vmatpush.bf16.msra.mxu0 0
      %402 = vmatpush.bf16.msra.mxu0 0
      %403 = vmatpush.bf16.msra.mxu0 0
      %404 = vmatpush.bf16.msra.mxu0 0
      %405 = vmatpush.bf16.msra.mxu0 %v392
      %406 = vmatpush.bf16.msra.mxu0 %v391
      %407 = vmatpush.bf16.msra.mxu0 %v390
      %408 = vmatpush.bf16.msra.mxu0 %v389
      %409 = vmatmul.bf16.gmra.mxu0 %v399
      %v410 = vpop.f32.mrf.mxu0
      %v411 = vadd.f32 %v371, %v410
      %v412 = vpop.f32.mrf.mxu0
      %413 = vdwg.mxu0
      %v414 = vperm.slane %v367, 1
      %v415 = vunpack.c.h.b16 %v359
      %v416 = vunpack.c.h.b16 %v360
      %v417 = vunpack.c.h.b16 %v361
      %v418 = vunpack.c.h.b16 %v362
      %v419 = vunpack.c.h.b16 %v363
      %v420 = vunpack.c.h.b16 %v364
      %v421 = vunpack.c.h.b16 %v365
      %v422 = vunpack.c.h.b16 %v366
      %v423 = vpack.c.b16 %v416, %v415
      %v424 = vpack.c.b16 %v418, %v417
      %v425 = vpack.c.b16 %v420, %v419
      %v426 = vpack.c.b16 %v422, %v421
      %427 = vrot.lane.b32.xlu0 %v389, 64
      %v428 = vpop.permute.xlu0 %427
      %429 = vrot.lane.b32.xlu0 %v423, 64
      %v430 = vpop.permute.xlu0 %429
      %431 = vrot.lane.b32.xlu0 %v390, 64
      %v432 = vpop.permute.xlu0 %431
      %433 = vrot.lane.b32.xlu0 %v424, 64
      %v434 = vpop.permute.xlu0 %433
      %435 = vrot.lane.b32.xlu0 %v391, 64
      %v436 = vpop.permute.xlu0 %435
      %437 = vrot.lane.b32.xlu0 %v425, 64
      %v438 = vpop.permute.xlu0 %437
      %439 = vrot.lane.b32.xlu0 %v392, 64
      %v440 = vpop.permute.xlu0 %439
      %441 = vrot.lane.b32.xlu0 %v426, 64
      %v442 = vpop.permute.xlu0 %441
      %vm443 = vcmask 523264
      %v444 = vsel %vm443, %v428, %v430
      %v445 = vsel %vm443, %v432, %v434
      %v446 = vsel %vm443, %v436, %v438
      %v447 = vsel %vm443, %v440, %v442
      %452 = vrot.lane.b32.xlu0 %v371, 64
      %v453 = vpop.permute.xlu0 %452
      %454 = vrot.lane.b32.xlu0 %v414, 64
      %v455 = vpop.permute.xlu0 %454
      %v456 = vsel %vm397, %v453, %v455
      %v459 = vsel %vm397, %v369, 0
      %461 = vmatpush.bf16.msra.mxu0 0
      %462 = vmatpush.bf16.msra.mxu0 0
      %463 = vmatpush.bf16.msra.mxu0 0
      %464 = vmatpush.bf16.msra.mxu0 0
      %465 = vmatpush.bf16.msra.mxu0 %v447
      %466 = vmatpush.bf16.msra.mxu0 %v446
      %467 = vmatpush.bf16.msra.mxu0 %v445
      %468 = vmatpush.bf16.msra.mxu0 %v444
      %469 = vmatmul.bf16.gmra.mxu0 %v459
      %v470 = vpop.f32.mrf.mxu0
      %v471 = vadd.f32 %v456, %v470
      %v472 = vpop.f32.mrf.mxu0
      %473 = vdwg.mxu0
      %v474 = vpack.c.bf16 %v411, %v411
      %v475 = vpack.c.bf16 %v471, %v471
      %vm476 = vcmask 130048
      %v478 = vsel %vm476, %v474, 0
      %v481 = vsel %vm476, %v475, 0
      %483 = vmatpush.bf16.xpose.msra.mxu0 0
      %484 = vmatpush.bf16.xpose.msra.mxu0 0
      %485 = vmatpush.bf16.xpose.msra.mxu0 0
      %486 = vmatpush.bf16.xpose.msra.mxu0 0
      %487 = vmatpush.bf16.xpose.msra.mxu0 0
      %488 = vmatpush.bf16.xpose.msra.mxu0 0
      %489 = vmatpush.bf16.xpose.msra.mxu0 0
      %490 = vmatpush.bf16.xpose.msra.mxu0 %v481
      %491 = vmatmul.bf16.gmra.mxu0 %v478
      %v492 = vpop.f32.mrf.mxu0
      %v493 = vadd.f32 0.0, %v492
      %v494 = vpop.f32.mrf.mxu0
      %495 = vdwg.mxu0
      %vm496 = vcmask 64512
      %v497 = vsel %vm496, %v493, -inf
      %498 = vmax.xlane.f32.xlu0 %v497
      %v499 = vpop.xlane.xlu0 %498
      %v500 = vsub.f32 %v493, %v499
      %v501 = vmul.f32 %v500, 1.442695
      %v502 = vpow.pop %v501
      %v503 = vsel %vm496, %v502, 0.0
      %504 = vadd.xlane.f32.xlu0 %v503
      %v505 = vpop.xlane.xlu0 %504
      %v506 = vrcp.pop %v505
      %v507 = vmul.f32 %v502, %v506
      %v508 = vpack.c.bf16 %v507, %v507
      %510 = vrot.lane.b32.xlu0 %v475, 64
      %v511 = vpop.permute.xlu0 %510
      %v513 = vsel %vm496, %v508, 0
      %vm515 = vcmask 1043456
      %v517 = vsel %vm515, %v511, 0
      %519 = vmatpush.bf16.msra.mxu0 0
      %520 = vmatpush.bf16.msra.mxu0 0
      %521 = vmatpush.bf16.msra.mxu0 0
      %522 = vmatpush.bf16.msra.mxu0 0
      %523 = vmatpush.bf16.msra.mxu0 0
      %524 = vmatpush.bf16.msra.mxu0 0
      %525 = vmatpush.bf16.msra.mxu0 0
      %526 = vmatpush.bf16.msra.mxu0 %v517
      %527 = vmatmul.bf16.gmra.mxu0 %v513
      %v528 = vpop.f32.mrf.mxu0
      %v529 = vadd.f32 0.0, %v528
      %v530 = vpop.f32.mrf.mxu0
      %531 = vdwg.mxu0
      %533 = vrot.lane.b32.xlu0 %v474, 112
      %v534 = vpop.permute.xlu0 %533
      %535 = vrot.lane.b32.xlu0 %v475, 112
      %v536 = vpop.permute.xlu0 %535
      %v538 = vsel %vm476, %v534, 0
      %v541 = vsel %vm476, %v536, 0
      %543 = vmatpush.bf16.xpose.msra.mxu0 0
      %544 = vmatpush.bf16.xpose.msra.mxu0 0
      %545 = vmatpush.bf16.xpose.msra.mxu0 0
      %546 = vmatpush.bf16.xpose.msra.mxu0 0
      %547 = vmatpush.bf16.xpose.msra.mxu0 0
      %548 = vmatpush.bf16.xpose.msra.mxu0 0
      %549 = vmatpush.bf16.xpose.msra.mxu0 0
      %550 = vmatpush.bf16.xpose.msra.mxu0 %v541
      %551 = vmatmul.bf16.gmra.mxu0 %v538
      %v552 = vpop.f32.mrf.mxu0
      %v553 = vadd.f32 0.0, %v552
      %v554 = vpop.f32.mrf.mxu0
      %555 = vdwg.mxu0
      %v556 = vsel %vm496, %v553, -inf
      %557 = vmax.xlane.f32.xlu0 %v556
      %v558 = vpop.xlane.xlu0 %557
      %v559 = vsub.f32 %v553, %v558
      %v560 = vmul.f32 %v559, 1.442695
      %v561 = vpow.pop %v560
      %v562 = vsel %vm496, %v561, 0.0
      %563 = vadd.xlane.f32.xlu0 %v562
      %v564 = vpop.xlane.xlu0 %563
      %v565 = vrcp.pop %v564
      %v566 = vmul.f32 %v561, %v565
      %v567 = vpack.c.bf16 %v566, %v566
      %568 = vrot.lane.b32.xlu0 %v475, 48
      %v569 = vpop.permute.xlu0 %568
      %v571 = vsel %vm496, %v567, 0
      %v574 = vsel %vm515, %v569, 0
      %576 = vmatpush.bf16.msra.mxu0 0
      %577 = vmatpush.bf16.msra.mxu0 0
      %578 = vmatpush.bf16.msra.mxu0 0
      %579 = vmatpush.bf16.msra.mxu0 0
      %580 = vmatpush.bf16.msra.mxu0 0
      %581 = vmatpush.bf16.msra.mxu0 0
      %582 = vmatpush.bf16.msra.mxu0 0
      %583 = vmatpush.bf16.msra.mxu0 %v574
      %584 = vmatmul.bf16.gmra.mxu0 %v571
      %v585 = vpop.f32.mrf.mxu0
      %v586 = vadd.f32 0.0, %v585
      %v587 = vpop.f32.mrf.mxu0
      %588 = vdwg.mxu0
      %589 = vrot.lane.b32.xlu0 %v474, 96
      %v590 = vpop.permute.xlu0 %589
      %591 = vrot.lane.b32.xlu0 %v475, 96
      %v592 = vpop.permute.xlu0 %591
      %v594 = vsel %vm476, %v590, 0
      %v597 = vsel %vm476, %v592, 0
      %599 = vmatpush.bf16.xpose.msra.mxu0 0
      %600 = vmatpush.bf16.xpose.msra.mxu0 0
      %601 = vmatpush.bf16.xpose.msra.mxu0 0
      %602 = vmatpush.bf16.xpose.msra.mxu0 0
      %603 = vmatpush.bf16.xpose.msra.mxu0 0
      %604 = vmatpush.bf16.xpose.msra.mxu0 0
      %605 = vmatpush.bf16.xpose.msra.mxu0 0
      %606 = vmatpush.bf16.xpose.msra.mxu0 %v597
      %607 = vmatmul.bf16.gmra.mxu0 %v594
      %v608 = vpop.f32.mrf.mxu0
      %v609 = vadd.f32 0.0, %v608
      %v610 = vpop.f32.mrf.mxu0
      %611 = vdwg.mxu0
      %v612 = vsel %vm496, %v609, -inf
      %613 = vmax.xlane.f32.xlu0 %v612
      %v614 = vpop.xlane.xlu0 %613
      %v615 = vsub.f32 %v609, %v614
      %v616 = vmul.f32 %v615, 1.442695
      %v617 = vpow.pop %v616
      %v618 = vsel %vm496, %v617, 0.0
      %619 = vadd.xlane.f32.xlu0 %v618
      %v620 = vpop.xlane.xlu0 %619
      %v621 = vrcp.pop %v620
      %v622 = vmul.f32 %v617, %v621
      %v623 = vpack.c.bf16 %v622, %v622
      %624 = vrot.lane.b32.xlu0 %v475, 32
      %v625 = vpop.permute.xlu0 %624
      %v627 = vsel %vm496, %v623, 0
      %v630 = vsel %vm515, %v625, 0
      %632 = vmatpush.bf16.msra.mxu0 0
      %633 = vmatpush.bf16.msra.mxu0 0
      %634 = vmatpush.bf16.msra.mxu0 0
      %635 = vmatpush.bf16.msra.mxu0 0
      %636 = vmatpush.bf16.msra.mxu0 0
      %637 = vmatpush.bf16.msra.mxu0 0
      %638 = vmatpush.bf16.msra.mxu0 0
      %639 = vmatpush.bf16.msra.mxu0 %v630
      %640 = vmatmul.bf16.gmra.mxu0 %v627
      %v641 = vpop.f32.mrf.mxu0
      %v642 = vadd.f32 0.0, %v641
      %v643 = vpop.f32.mrf.mxu0
      %644 = vdwg.mxu0
      %645 = vrot.lane.b32.xlu0 %v474, 80
      %v646 = vpop.permute.xlu0 %645
      %647 = vrot.lane.b32.xlu0 %v475, 80
      %v648 = vpop.permute.xlu0 %647
      %v650 = vsel %vm476, %v646, 0
      %v653 = vsel %vm476, %v648, 0
      %655 = vmatpush.bf16.xpose.msra.mxu0 0
      %656 = vmatpush.bf16.xpose.msra.mxu0 0
      %657 = vmatpush.bf16.xpose.msra.mxu0 0
      %658 = vmatpush.bf16.xpose.msra.mxu0 0
      %659 = vmatpush.bf16.xpose.msra.mxu0 0
      %660 = vmatpush.bf16.xpose.msra.mxu0 0
      %661 = vmatpush.bf16.xpose.msra.mxu0 0
      %662 = vmatpush.bf16.xpose.msra.mxu0 %v653
      %663 = vmatmul.bf16.gmra.mxu0 %v650
      %v664 = vpop.f32.mrf.mxu0
      %v665 = vadd.f32 0.0, %v664
      %v666 = vpop.f32.mrf.mxu0
      %667 = vdwg.mxu0
      %v668 = vsel %vm496, %v665, -inf
      %669 = vmax.xlane.f32.xlu0 %v668
      %v670 = vpop.xlane.xlu0 %669
      %v671 = vsub.f32 %v665, %v670
      %v672 = vmul.f32 %v671, 1.442695
      %v673 = vpow.pop %v672
      %v674 = vsel %vm496, %v673, 0.0
      %675 = vadd.xlane.f32.xlu0 %v674
      %v676 = vpop.xlane.xlu0 %675
      %v677 = vrcp.pop %v676
      %v678 = vmul.f32 %v673, %v677
      %v679 = vpack.c.bf16 %v678, %v678
      %680 = vrot.lane.b32.xlu0 %v475, 16
      %v681 = vpop.permute.xlu0 %680
      %v683 = vsel %vm496, %v679, 0
      %v686 = vsel %vm515, %v681, 0
      %688 = vmatpush.bf16.msra.mxu0 0
      %689 = vmatpush.bf16.msra.mxu0 0
      %690 = vmatpush.bf16.msra.mxu0 0
      %691 = vmatpush.bf16.msra.mxu0 0
      %692 = vmatpush.bf16.msra.mxu0 0
      %693 = vmatpush.bf16.msra.mxu0 0
      %694 = vmatpush.bf16.msra.mxu0 0
      %695 = vmatpush.bf16.msra.mxu0 %v686
      %696 = vmatmul.bf16.gmra.mxu0 %v683
      %v697 = vpop.f32.mrf.mxu0
      %v698 = vadd.f32 0.0, %v697
      %v699 = vpop.f32.mrf.mxu0
      %700 = vdwg.mxu0
      %702 = vrot.lane.b32.xlu0 %v586, 16
      %v703 = vpop.permute.xlu0 %702
      %706 = vrot.lane.b32.xlu0 %v642, 32
      %v707 = vpop.permute.xlu0 %706
      %710 = vrot.lane.b32.xlu0 %v698, 48
      %v711 = vpop.permute.xlu0 %710
      %v713 = vsel %vm476, %v529, %v703
      %vm714 = vcmask 261120
      %v715 = vsel %vm714, %v713, %v707
      %vm716 = vcmask 392192
      %v717 = vsel %vm716, %v715, %v711
      %v718 = vpack.c.bf16 %v717, %v717
      %v719 = vld [vmem:[%s4] sm:$0xf]
      %v720 = vld [vmem:[%s4 + $0x4] sm:$0xf]
      %v721 = vld [vmem:[%s4 + $0x8] sm:$0xf]
      %v722 = vld [vmem:[%s4 + $0xc] sm:$0xf]
      %v723 = vld [vmem:[%s4 + $0x10] sm:$0xf]
      %v724 = vld [vmem:[%s4 + $0x14] sm:$0xf]
      %v725 = vld [vmem:[%s4 + $0x18] sm:$0xf]
      %v726 = vld [vmem:[%s4 + $0x1c] sm:$0xf]
      %v727 = vld [vmem:[%s5] sm:$0x1]
      %v729 = vperm.slane %v727, 0
      %v739 = vunpack.c.l.b16 %v719
      %v740 = vunpack.c.l.b16 %v720
      %v741 = vunpack.c.l.b16 %v721
      %v742 = vunpack.c.l.b16 %v722
      %v743 = vunpack.c.l.b16 %v723
      %v744 = vunpack.c.l.b16 %v724
      %v745 = vunpack.c.l.b16 %v725
      %v746 = vunpack.c.l.b16 %v726
      %v747 = vpack.c.b16 %v740, %v739
      %v748 = vpack.c.b16 %v742, %v741
      %v749 = vpack.c.b16 %v744, %v743
      %v750 = vpack.c.b16 %v746, %v745
      %v756 = vsel %vm397, %v718, 0
      %758 = vmatpush.bf16.msra.mxu0 0
      %759 = vmatpush.bf16.msra.mxu0 0
      %760 = vmatpush.bf16.msra.mxu0 0
      %761 = vmatpush.bf16.msra.mxu0 0
      %762 = vmatpush.bf16.msra.mxu0 %v750
      %763 = vmatpush.bf16.msra.mxu0 %v749
      %764 = vmatpush.bf16.msra.mxu0 %v748
      %765 = vmatpush.bf16.msra.mxu0 %v747
      %766 = vmatmul.bf16.gmra.mxu0 %v756
      %v767 = vpop.f32.mrf.mxu0
      %v768 = vadd.f32 %v729, %v767
      %v769 = vpop.f32.mrf.mxu0
      %770 = vdwg.mxu0
      %771 = vst.msk [vmem:[%s351] sm:$0xff] %vm397, %v768
      %v772 = vadd.f32 %v768, %v357
      %v773 = vsel %vm397, %v772, 0.0
      %774 = vadd.xlane.f32.xlu0 %v773
      %v775 = vpop.xlane.xlu0 %774
      %v776 = vrcp.pop 64.0
      %v777 = vmul.f32 64.0, %v776
      %v778 = vsub.f32 1.0, %v777
      %v779 = vmul.f32 %v776, %v778
      %v780 = vadd.f32 %v776, %v779
      %vm781 = vweird.f32 %v776
      %v782 = vsel %vm781, %v776, %v780
      %v783 = vmul.f32 %v775, %v782
      %v784 = vsub.f32 %v772, %v783
      %v785 = vmul.f32 %v784, %v784
      %v786 = vsel %vm397, %v785, 0.0
      %787 = vadd.xlane.f32.xlu0 %v786
      %v788 = vpop.xlane.xlu0 %787
      %v789 = vmul.f32 %v788, %v782
      %v790 = vadd.f32 %v789, 1e-05
      %v791 = vrsqrt.pop %v790
      %v792 = vmul.f32 %v791, %v790
      %v793 = vmul.f32 %v792, %v791
      %v794 = vmul.f32 0.5, %v793
      %v795 = vsub.f32 1.5, %v794
      %v796 = vmul.f32 %v791, %v795
      %vm797 = vweird.f32 %v790
      %vm798 = vweird.f32 %v791
      %vm799 = vmor %vm797, %vm798
      %v800 = vsel %vm799, %v791, %v796
      %v801 = vmul.f32 %v784, %v800
      %v802 = vld [vmem:[%s6] sm:$0x1]
      %v804 = vperm.slane %v802, 0
      %v806 = vmul.f32 %v801, %v804
      %v807 = vld [vmem:[%s7] sm:$0x1]
      %v809 = vperm.slane %v807, 0
      %v811 = vadd.f32 %v806, %v809
      %812 = vst.msk [vmem:[%s355] sm:$0xff] %vm397, %v811
      %p813 = scmp.lt.s32.totalorder %s21, 1
      %s814 = scalar_select %p813, %s21, 1
      %s815 = smul.addr %s814, 8
      %s816 = scalar_lea.vmem %s8, %s815
      %p817 = scmp.lt.s32.totalorder %s21, 1
      %s818 = scalar_select %p817, %s21, 1
      %s819 = smul.addr %s818, 8
      %s820 = scalar_lea.vmem %s9, %s819
      // Predicated region
      $region53: #{decoder_forward.4} parent=51 // pred_check
        %p821 = pneg %p217
      $region54: #{decoder_forward.4} parent=51 // pred_check_branch
        %823 = sbr.rel (%p821) target = $region56
      $region55: #{decoder_forward.4} parent=51 // pred_region
        _
      $region56: #{decoder_forward.4} parent=51 // pred_fallthru
        _
      // Predicated region
      $region57: #{decoder_forward.4} parent=51 // pred_check
        %p824 = pneg %p243
      $region58: #{decoder_forward.4} parent=51 // pred_check_branch
        %826 = sbr.rel (%p824) target = $region60
      $region59: #{decoder_forward.4} parent=51 // pred_region
        _
      $region60: #{decoder_forward.4} parent=51 // pred_fallthru
        _
    $region52: #{decoder_forward.4} parent=5 // pred_fallthru
      _
    %p827 = scmp.le.s32.totalorder 2, %s16
    // Predicated region
    $region61: #{decoder_forward.4} parent=5 // pred_check
      %p828 = pneg %p827
    $region62: #{decoder_forward.4} parent=5 // pred_check_branch
      %830 = sbr.rel (%p828) target = $region64
    $region63: #{decoder_forward.4} parent=5 // pred_region
      %s831 = ssub.s32 %s16, 2
      // Predicated region
      $region65: #{decoder_forward.4} parent=63 // pred_check
        %p832 = pneg %p223
      $region66: #{decoder_forward.4} parent=63 // pred_check_branch
        %834 = sbr.rel (%p832) target = $region68
      $region67: #{decoder_forward.4} parent=63 // pred_region
        %p835 = scmp.lt.s32.totalorder %s22, 1
        %s836 = scalar_select %p835, %s22, 1
        %s837 = smul.addr %s836, 8
        %s838 = scalar_lea.vmem %s8, %s837
      $region68: #{decoder_forward.4} parent=63 // pred_fallthru
        _
      // Predicated region
      $region69: #{decoder_forward.4} parent=63 // pred_check
        %p839 = pneg %p249
      $region70: #{decoder_forward.4} parent=63 // pred_check_branch
        %841 = sbr.rel (%p839) target = $region72
      $region71: #{decoder_forward.4} parent=63 // pred_region
        %p842 = scmp.lt.s32.totalorder %s22, 1
        %s843 = scalar_select %p842, %s22, 1
        %s844 = smul.addr %s843, 8
        %s845 = scalar_lea.vmem %s9, %s844
      $region72: #{decoder_forward.4} parent=63 // pred_fallthru
        _
    $region64: #{decoder_forward.4} parent=5 // pred_fallthru
      _
  $region6: #{decoder_forward.4} parent=0 // loop_footer
    %s20 = sadd.s32 1, %s16
  $region7: #{decoder_forward.4} parent=0 // loop_footer_branch
    %15 = sbr.rel target = $region3
  $region8: #{decoder_forward.4} parent=0 // loop_exit
    _

</llo_original>
